<compile_context>
chip_gen: v5e
topology: v5e:2x2
jax: 0.10.0
libtpu: 0.0.40
codegen_flags: <defaults>
</compile_context>

<pallas_src>
import functools

import jax
import jax.numpy as jnp
from jax.experimental import pallas as pl
from jax.experimental.pallas import tpu as pltpu


def _round_up(a, b):
    return ((a + b - 1) // b) * b


def _cdiv(a, b):
    return -(-a // b)


def _conv_bn_relu_kernel(x_ref, w_ref, b_ref, o_ref, *, tm, wp, kh, kw):
    # x_ref: (R_full, Cin) bf16   flattened padded input rows for one sample
    # w_ref: (kh*kw, Cin, tn) bf16 BN-scale-folded weights for this Cout tile
    # b_ref: (1, tn) f32           folded BN bias
    # o_ref: (tm, tn) f32          output row tile (lane-dense)
    r = pl.program_id(2)
    base = pl.multiple_of(r * tm, 16)          # tm is a multiple of 16 (bf16)
    halo = (kh - 1) * wp + (kw - 1)
    # One aligned dynamic window load per tile; every tap is a static slice
    # of this single value (the kh*kw windows overlap ~90% when Wp << tm).
    win = x_ref[pl.ds(base, tm + halo), :]
    # Local f32 value accumulator; o_ref is stored exactly once below.
    acc = jnp.zeros(o_ref.shape, jnp.float32)
    for dh in range(kh):
        for dw in range(kw):
            off = dh * wp + dw
            acc = acc + jnp.dot(win[off:off + tm, :], w_ref[dh * kw + dw],
                                preferred_element_type=jnp.float32)
    o_ref[...] = jnp.maximum(acc + b_ref[...], 0.0)


@functools.partial(
    jax.jit, static_argnames=("kernel_size", "stride", "padding", "eps"))
def basic_conv2d(x_nchw, weight, gamma, beta, running_mean, running_var,
                 *, kernel_size=3, stride=1, padding=1, eps=1e-3):
    """Equivalent of BasicConv2d.forward (eval-mode BN) for stride=1 convs.

    x_nchw: (N, Cin, H, W) f32, weight: (Cout, Cin, KH, KW) f32 (PyTorch OIHW)
    returns (N, Cout, H_out, W_out) f32
    """
    kh, kw = ((kernel_size, kernel_size) if isinstance(kernel_size, int)
              else kernel_size)
    ph, pw = (padding, padding) if isinstance(padding, int) else padding
    assert stride == 1, "only stride=1 BasicConv2d configs are kernelized"

    N, Cin, H, W = x_nchw.shape
    Cout = weight.shape[0]
    assert weight.shape == (Cout, Cin, kh, kw)

    Hp, Wp = H + 2 * ph, W + 2 * pw
    H_out = Hp - kh + 1
    W_out = Wp - kw + 1

    # ---- tiling choices (static) -------------------------------------------
    lane = 128
    Cout_pad = _round_up(Cout, lane)
    # 256-wide output tile fills the v6e/v7x 256x256 MXU per weight push;
    # tn=128 otherwise (and is already optimal for v5e's 128x128 MXU).
    tn = 256 if (Cout_pad >= 256 and Cout_pad % 256 == 0) else 128
    n_j = Cout_pad // tn

    # Output rows are enumerated p = h*Wp + w (kw-1 junk columns per row are
    # computed and sliced off afterwards — keeps all in-kernel slices as
    # plain row shifts of one flat array, no im2col / no in-kernel reshape).
    P = H_out * Wp
    tm_target = 512
    n_r = max(1, _cdiv(P, tm_target))
    tm = _round_up(_cdiv(P, n_r), 16)              # 16 = bf16 sublane packing
    P_pad = n_r * tm
    halo = (kh - 1) * Wp + (kw - 1)
    rows_needed = P_pad + halo                     # flat rows incl. halo

    # ---- host glue (layout only, O(|x|); no 9x im2col) ---------------------
    x_nhwc = jnp.transpose(x_nchw, (0, 2, 3, 1))
    extra_rows = _cdiv(max(rows_needed - Hp * Wp, 0), Wp)
    xp = jnp.pad(x_nhwc, ((0, 0), (ph, ph + extra_rows), (pw, pw), (0, 0)))
    R_full = (Hp + extra_rows) * Wp
    x_flat = xp.reshape(N, R_full, Cin).astype(jnp.bfloat16)   # bf16 operand

    scale = (gamma / jnp.sqrt(running_var + eps)).astype(jnp.float32)  # (Cout,)
    bias = (beta - running_mean * scale).astype(jnp.float32)           # (Cout,)
    # (Cout, Cin, KH, KW) -> (KH*KW, Cin, Cout); fold BN scale into weights
    # in f32, then cast the folded weights to bf16.
    w_mat = jnp.transpose(weight, (2, 3, 1, 0)).reshape(kh * kw, Cin, Cout)
    w_mat = (w_mat.astype(jnp.float32) * scale[None, None, :])
    w_mat = jnp.pad(w_mat, ((0, 0), (0, 0), (0, Cout_pad - Cout)))
    w_mat = w_mat.astype(jnp.bfloat16)
    bias = jnp.pad(bias, (0, Cout_pad - Cout)).reshape(1, Cout_pad)

    kernel = functools.partial(_conv_bn_relu_kernel, tm=tm, wp=Wp, kh=kh, kw=kw)

    # ---- VMEM budget from actual block footprints --------------------------
    x_blk = R_full * Cin * 2            # bf16, per buffer
    w_blk = kh * kw * Cin * tn * 2
    b_blk = tn * 4
    o_blk = tm * tn * 4
    win_b = (tm + halo) * Cin * 2       # hoisted window copy
    acc_b = tm * tn * 4                 # f32 accumulator
    need = 2 * (x_blk + w_blk + b_blk + o_blk) + win_b + acc_b
    vmem_limit = int(min(max(need * 5 // 4 + (8 << 20), 24 << 20), 96 << 20))

    flops = 2 * N * P_pad * (kh * kw * Cin) * Cout_pad
    bytes_accessed = (2 * (x_flat.size + w_mat.size)
                      + 4 * (bias.size + N * P_pad * Cout_pad))

    out_flat = pl.pallas_call(
        kernel,
        out_shape=jax.ShapeDtypeStruct((N, P_pad, Cout_pad), jnp.float32),
        grid_spec=pltpu.PrefetchScalarGridSpec(
            num_scalar_prefetch=0,
            grid=(N, n_j, n_r),
            in_specs=[
                # whole flattened padded image for sample n (fetched once / n)
                pl.BlockSpec((None, R_full, Cin), lambda n, j, r: (n, 0, 0)),
                # folded weights / bias for Cout tile j (fetched once / j)
                pl.BlockSpec((kh * kw, Cin, tn), lambda n, j, r: (0, 0, j)),
                pl.BlockSpec((1, tn), lambda n, j, r: (0, j)),
            ],
            out_specs=pl.BlockSpec((None, tm, tn), lambda n, j, r: (n, r, j)),
        ),
        compiler_params=pltpu.CompilerParams(
            dimension_semantics=("parallel", "parallel", "parallel"),
            vmem_limit_bytes=vmem_limit),
        cost_estimate=pl.CostEstimate(flops=flops, transcendentals=0,
                                      bytes_accessed=bytes_accessed),
    )(x_flat, w_mat, bias)

    out = out_flat[:, :P, :Cout].reshape(N, H_out, Wp, Cout)[:, :, :W_out, :]
    return jnp.transpose(out, (0, 3, 1, 2))              # NHWC -> NCHW


def _reference(x_nchw, weight, gamma, beta, running_mean, running_var,
               padding=1, eps=1e-3):
    # Pure-JAX f32 reference of the PyTorch forward (eval-mode BN).
    y = jax.lax.conv_general_dilated(
        x_nchw, weight, window_strides=(1, 1),
        padding=[(padding, padding), (padding, padding)],
        dimension_numbers=("NCHW", "OIHW", "NCHW"))
    scale = (gamma / jnp.sqrt(running_var + eps)).reshape(1, -1, 1, 1)
    bias = (beta - running_mean * gamma / jnp.sqrt(running_var + eps)
            ).reshape(1, -1, 1, 1)
    return jnp.maximum(y * scale + bias, 0.0)


def _make_inputs(key, N, Cin, H, W, Cout, ksz):
    k_x, k_w, k_g, k_b, k_m, k_v = jax.random.split(key, 6)
    x = jax.random.normal(k_x, (N, Cin, H, W), dtype=jnp.float32)
    weight = jax.random.normal(k_w, (Cout, Cin, ksz, ksz),
                               dtype=jnp.float32) * 0.1
    gamma = jax.random.uniform(k_g, (Cout,), minval=0.5, maxval=1.5,
                               dtype=jnp.float32)
    beta = jax.random.normal(k_b, (Cout,), dtype=jnp.float32) * 0.1
    running_mean = jax.random.normal(k_m, (Cout,), dtype=jnp.float32) * 0.1
    running_var = jax.random.uniform(k_v, (Cout,), minval=0.5, maxval=1.5,
                                     dtype=jnp.float32)
    return x, weight, gamma, beta, running_mean, running_var


def _check(key, N, Cin, H, W, Cout, ksz, pad):
    x, w, g, b, m, v = _make_inputs(key, N, Cin, H, W, Cout, ksz)
    out = basic_conv2d(x, w, g, b, m, v,
                       kernel_size=ksz, stride=1, padding=pad, eps=1e-3)
    out = jax.block_until_ready(out)
    ref = _reference(x, w, g, b, m, v, padding=pad, eps=1e-3)
    assert out.shape == ref.shape, (out.shape, ref.shape)
    # bf16 operands + f32 accumulation vs f32 reference -> loosened tolerance.
    assert jnp.allclose(out, ref, atol=5e-2, rtol=5e-2), (
        float(jnp.max(jnp.abs(out - ref))))


if __name__ == "__main__":
    key = jax.random.PRNGKey(0)
    k1, k2 = jax.random.split(key, 2)

    # Small case (matches the module's typical smoke-test shape):
    # single row tile, single Cout tile.
    _check(k1, N=2, Cin=4, H=16, W=16, Cout=8, ksz=3, pad=1)

    # Tiling-coverage case: n_r > 1, n_j > 1, tn = 256, extra_rows > 0.
    _check(k2, N=1, Cin=16, H=33, W=33, Cout=512, ksz=3, pad=1)

    print("KERNEL_OK")
</pallas_src>

<mosaic_0001>
module attributes {stable_mosaic.version = 11 : i64} {
  func.func @_conv_bn_relu_kernel(%arg0: i32, %arg1: i32, %arg2: i32, %arg3: memref<1x342x4xbf16, #tpu.memory_space<vmem>>, %arg4: memref<9x4x128xbf16, #tpu.memory_space<vmem>>, %arg5: memref<1x128xf32, #tpu.memory_space<vmem>>, %arg6: memref<1x288x128xf32, #tpu.memory_space<vmem>>) attributes {dimension_semantics = [#tpu.dimension_semantics<parallel>, #tpu.dimension_semantics<parallel>, #tpu.dimension_semantics<parallel>], iteration_bounds = array<i64: 2, 1, 1>, scalar_prefetch = 0 : i64, scratch_operands = 0 : i64, tpu.core_type = #tpu.core_type<tc>, window_params = [{transform_indices = @transform_0, window_bounds = array<i64: 1, 342, 4>}, {transform_indices = @transform_1, window_bounds = array<i64: 9, 4, 128>}, {transform_indices = @transform_2, window_bounds = array<i64: 1, 128>}, {transform_indices = @transform_3, window_bounds = array<i64: 1, 288, 128>}]} {
    %c288_i32 = arith.constant 288 : i32
    %0 = arith.muli %arg2, %c288_i32 : i32
    %1 = tpu.assume_multiple %0, 16 : i32
    %c0 = arith.constant 0 : index
    %2 = arith.index_cast %1 : i32 to index
    %c0_0 = arith.constant 0 : index
    %3 = vector.load %arg3[%c0, %2, %c0_0] : memref<1x342x4xbf16, #tpu.memory_space<vmem>>, vector<1x326x4xbf16>
    %4 = vector.shape_cast %3 : vector<1x326x4xbf16> to vector<326x4xbf16>
    %cst = arith.constant 0.000000e+00 : f32
    %5 = vector.broadcast %cst : f32 to vector<288x128xf32>
    %6 = vector.extract_strided_slice %4 {offsets = [0, 0], sizes = [288, 4], strides = [1, 1]} : vector<326x4xbf16> to vector<288x4xbf16>
    %c0_1 = arith.constant 0 : index
    %c0_2 = arith.constant 0 : index
    %c0_3 = arith.constant 0 : index
    %7 = vector.load %arg4[%c0_1, %c0_2, %c0_3] : memref<9x4x128xbf16, #tpu.memory_space<vmem>>, vector<1x4x128xbf16>
    %8 = vector.shape_cast %7 : vector<1x4x128xbf16> to vector<4x128xbf16>
    %cst_4 = arith.constant dense<0.000000e+00> : vector<288x128xf32>
    %9 = tpu.matmul %6, %8, %cst_4 {dimension_numbers = #tpu.dot_dimension_numbers<[1], [0], [0], [1], [0, 0, 1, 1], [], []>} : vector<288x4xbf16>, vector<4x128xbf16>, vector<288x128xf32> -> vector<288x128xf32>
    %10 = arith.addf %5, %9 : vector<288x128xf32>
    %11 = vector.extract_strided_slice %4 {offsets = [1, 0], sizes = [288, 4], strides = [1, 1]} : vector<326x4xbf16> to vector<288x4xbf16>
    %c1 = arith.constant 1 : index
    %c0_5 = arith.constant 0 : index
    %c0_6 = arith.constant 0 : index
    %12 = vector.load %arg4[%c1, %c0_5, %c0_6] : memref<9x4x128xbf16, #tpu.memory_space<vmem>>, vector<1x4x128xbf16>
    %13 = vector.shape_cast %12 : vector<1x4x128xbf16> to vector<4x128xbf16>
    %cst_7 = arith.constant dense<0.000000e+00> : vector<288x128xf32>
    %14 = tpu.matmul %11, %13, %cst_7 {dimension_numbers = #tpu.dot_dimension_numbers<[1], [0], [0], [1], [0, 0, 1, 1], [], []>} : vector<288x4xbf16>, vector<4x128xbf16>, vector<288x128xf32> -> vector<288x128xf32>
    %15 = arith.addf %10, %14 : vector<288x128xf32>
    %16 = vector.extract_strided_slice %4 {offsets = [2, 0], sizes = [288, 4], strides = [1, 1]} : vector<326x4xbf16> to vector<288x4xbf16>
    %c2 = arith.constant 2 : index
    %c0_8 = arith.constant 0 : index
    %c0_9 = arith.constant 0 : index
    %17 = vector.load %arg4[%c2, %c0_8, %c0_9] : memref<9x4x128xbf16, #tpu.memory_space<vmem>>, vector<1x4x128xbf16>
    %18 = vector.shape_cast %17 : vector<1x4x128xbf16> to vector<4x128xbf16>
    %cst_10 = arith.constant dense<0.000000e+00> : vector<288x128xf32>
    %19 = tpu.matmul %16, %18, %cst_10 {dimension_numbers = #tpu.dot_dimension_numbers<[1], [0], [0], [1], [0, 0, 1, 1], [], []>} : vector<288x4xbf16>, vector<4x128xbf16>, vector<288x128xf32> -> vector<288x128xf32>
    %20 = arith.addf %15, %19 : vector<288x128xf32>
    %21 = vector.extract_strided_slice %4 {offsets = [18, 0], sizes = [288, 4], strides = [1, 1]} : vector<326x4xbf16> to vector<288x4xbf16>
    %c3 = arith.constant 3 : index
    %c0_11 = arith.constant 0 : index
    %c0_12 = arith.constant 0 : index
    %22 = vector.load %arg4[%c3, %c0_11, %c0_12] : memref<9x4x128xbf16, #tpu.memory_space<vmem>>, vector<1x4x128xbf16>
    %23 = vector.shape_cast %22 : vector<1x4x128xbf16> to vector<4x128xbf16>
    %cst_13 = arith.constant dense<0.000000e+00> : vector<288x128xf32>
    %24 = tpu.matmul %21, %23, %cst_13 {dimension_numbers = #tpu.dot_dimension_numbers<[1], [0], [0], [1], [0, 0, 1, 1], [], []>} : vector<288x4xbf16>, vector<4x128xbf16>, vector<288x128xf32> -> vector<288x128xf32>
    %25 = arith.addf %20, %24 : vector<288x128xf32>
    %26 = vector.extract_strided_slice %4 {offsets = [19, 0], sizes = [288, 4], strides = [1, 1]} : vector<326x4xbf16> to vector<288x4xbf16>
    %c4 = arith.constant 4 : index
    %c0_14 = arith.constant 0 : index
    %c0_15 = arith.constant 0 : index
    %27 = vector.load %arg4[%c4, %c0_14, %c0_15] : memref<9x4x128xbf16, #tpu.memory_space<vmem>>, vector<1x4x128xbf16>
    %28 = vector.shape_cast %27 : vector<1x4x128xbf16> to vector<4x128xbf16>
    %cst_16 = arith.constant dense<0.000000e+00> : vector<288x128xf32>
    %29 = tpu.matmul %26, %28, %cst_16 {dimension_numbers = #tpu.dot_dimension_numbers<[1], [0], [0], [1], [0, 0, 1, 1], [], []>} : vector<288x4xbf16>, vector<4x128xbf16>, vector<288x128xf32> -> vector<288x128xf32>
    %30 = arith.addf %25, %29 : vector<288x128xf32>
    %31 = vector.extract_strided_slice %4 {offsets = [20, 0], sizes = [288, 4], strides = [1, 1]} : vector<326x4xbf16> to vector<288x4xbf16>
    %c5 = arith.constant 5 : index
    %c0_17 = arith.constant 0 : index
    %c0_18 = arith.constant 0 : index
    %32 = vector.load %arg4[%c5, %c0_17, %c0_18] : memref<9x4x128xbf16, #tpu.memory_space<vmem>>, vector<1x4x128xbf16>
    %33 = vector.shape_cast %32 : vector<1x4x128xbf16> to vector<4x128xbf16>
    %cst_19 = arith.constant dense<0.000000e+00> : vector<288x128xf32>
    %34 = tpu.matmul %31, %33, %cst_19 {dimension_numbers = #tpu.dot_dimension_numbers<[1], [0], [0], [1], [0, 0, 1, 1], [], []>} : vector<288x4xbf16>, vector<4x128xbf16>, vector<288x128xf32> -> vector<288x128xf32>
    %35 = arith.addf %30, %34 : vector<288x128xf32>
    %36 = vector.extract_strided_slice %4 {offsets = [36, 0], sizes = [288, 4], strides = [1, 1]} : vector<326x4xbf16> to vector<288x4xbf16>
    %c6 = arith.constant 6 : index
    %c0_20 = arith.constant 0 : index
    %c0_21 = arith.constant 0 : index
    %37 = vector.load %arg4[%c6, %c0_20, %c0_21] : memref<9x4x128xbf16, #tpu.memory_space<vmem>>, vector<1x4x128xbf16>
    %38 = vector.shape_cast %37 : vector<1x4x128xbf16> to vector<4x128xbf16>
    %cst_22 = arith.constant dense<0.000000e+00> : vector<288x128xf32>
    %39 = tpu.matmul %36, %38, %cst_22 {dimension_numbers = #tpu.dot_dimension_numbers<[1], [0], [0], [1], [0, 0, 1, 1], [], []>} : vector<288x4xbf16>, vector<4x128xbf16>, vector<288x128xf32> -> vector<288x128xf32>
    %40 = arith.addf %35, %39 : vector<288x128xf32>
    %41 = vector.extract_strided_slice %4 {offsets = [37, 0], sizes = [288, 4], strides = [1, 1]} : vector<326x4xbf16> to vector<288x4xbf16>
    %c7 = arith.constant 7 : index
    %c0_23 = arith.constant 0 : index
    %c0_24 = arith.constant 0 : index
    %42 = vector.load %arg4[%c7, %c0_23, %c0_24] : memref<9x4x128xbf16, #tpu.memory_space<vmem>>, vector<1x4x128xbf16>
    %43 = vector.shape_cast %42 : vector<1x4x128xbf16> to vector<4x128xbf16>
    %cst_25 = arith.constant dense<0.000000e+00> : vector<288x128xf32>
    %44 = tpu.matmul %41, %43, %cst_25 {dimension_numbers = #tpu.dot_dimension_numbers<[1], [0], [0], [1], [0, 0, 1, 1], [], []>} : vector<288x4xbf16>, vector<4x128xbf16>, vector<288x128xf32> -> vector<288x128xf32>
    %45 = arith.addf %40, %44 : vector<288x128xf32>
    %46 = vector.extract_strided_slice %4 {offsets = [38, 0], sizes = [288, 4], strides = [1, 1]} : vector<326x4xbf16> to vector<288x4xbf16>
    %c8 = arith.constant 8 : index
    %c0_26 = arith.constant 0 : index
    %c0_27 = arith.constant 0 : index
    %47 = vector.load %arg4[%c8, %c0_26, %c0_27] : memref<9x4x128xbf16, #tpu.memory_space<vmem>>, vector<1x4x128xbf16>
    %48 = vector.shape_cast %47 : vector<1x4x128xbf16> to vector<4x128xbf16>
    %cst_28 = arith.constant dense<0.000000e+00> : vector<288x128xf32>
    %49 = tpu.matmul %46, %48, %cst_28 {dimension_numbers = #tpu.dot_dimension_numbers<[1], [0], [0], [1], [0, 0, 1, 1], [], []>} : vector<288x4xbf16>, vector<4x128xbf16>, vector<288x128xf32> -> vector<288x128xf32>
    %50 = arith.addf %45, %49 : vector<288x128xf32>
    %c0_29 = arith.constant 0 : index
    %c0_30 = arith.constant 0 : index
    %51 = vector.load %arg5[%c0_29, %c0_30] : memref<1x128xf32, #tpu.memory_space<vmem>>, vector<1x128xf32>
    %52 = vector.broadcast %51 : vector<1x128xf32> to vector<288x128xf32>
    %53 = arith.addf %50, %52 : vector<288x128xf32>
    %cst_31 = arith.constant 0.000000e+00 : f32
    %54 = vector.broadcast %cst_31 : f32 to vector<288x128xf32>
    %55 = arith.maximumf %53, %54 : vector<288x128xf32>
    %c0_32 = arith.constant 0 : index
    %c0_33 = arith.constant 0 : index
    %c0_34 = arith.constant 0 : index
    %56 = vector.load %arg6[%c0_32, %c0_33, %c0_34] : memref<1x288x128xf32, #tpu.memory_space<vmem>>, vector<1x288x128xf32>
    %57 = vector.shape_cast %56 : vector<1x288x128xf32> to vector<288x128xf32>
    %58 = vector.shape_cast %55 : vector<288x128xf32> to vector<1x288x128xf32>
    tpu.vector_store %arg6[%c0_32, %c0_33, %c0_34], %58 {strides = array<i32>} : memref<1x288x128xf32, #tpu.memory_space<vmem>>, vector<1x288x128xf32>,
    return
  }
  func.func @transform_0(%arg0: i32, %arg1: i32, %arg2: i32) -> (i32, i32, i32) {
    %c0_i32 = arith.constant 0 : i32
    %c0_i32_0 = arith.constant 0 : i32
    %c0_i32_1 = arith.constant 0 : i32
    return %arg0, %c0_i32, %c0_i32_0 : i32, i32, i32
  }
  func.func @transform_1(%arg0: i32, %arg1: i32, %arg2: i32) -> (i32, i32, i32) {
    %c0_i32 = arith.constant 0 : i32
    %c0_i32_0 = arith.constant 0 : i32
    %c0_i32_1 = arith.constant 0 : i32
    return %c0_i32, %c0_i32_0, %arg1 : i32, i32, i32
  }
  func.func @transform_2(%arg0: i32, %arg1: i32, %arg2: i32) -> (i32, i32) {
    %c0_i32 = arith.constant 0 : i32
    %c0_i32_0 = arith.constant 0 : i32
    return %c0_i32, %arg1 : i32, i32
  }
  func.func @transform_3(%arg0: i32, %arg1: i32, %arg2: i32) -> (i32, i32, i32) {
    %c0_i32 = arith.constant 0 : i32
    return %arg0, %arg2, %arg1 : i32, i32, i32
  }
}

</mosaic_0001>

<llo_original>
// kernel: basic_conv2d.1
$region0: #{basic_conv2d.1}
  #allocation0 [shape = 'u32[]', space=smem, size = 0x4, offset = 0x4, fixed_abs, tag = 'smem constant byte address 0x4 - core index']
  #allocation1 [shape = 'u32[72,128]{1,0:T(1,128)}', space=vmem, size = 0x9000, scoped, tag = 'internal scratch']
  %s0 = inlined_call_operand.vmem [shape: bf16[2,342,4], index: 0, kind: input, shape index: {}]
  %s1 = inlined_call_operand.vmem [shape: bf16[9,4,128], index: 1, kind: input, shape index: {}]
  %s2 = inlined_call_operand.vmem [shape: f32[1,128], index: 2, kind: input, shape index: {}]
  %s3 = inlined_call_operand.vmem [shape: f32[2,288,128], index: 3, kind: output, shape index: {}]
  %s4 = sld [smem:[#allocation0]]
  $region45: #{basic_conv2d.1} parent=0
    _
  %s6 = ssub.s32 1, %s4
  %s7 = scalar_select 0, %s6, %s4
  loop: start=0, step=1, limit=4
  $region2: #{basic_conv2d.1} parent=0 // loop_pre_header
    _
  $region3: #{basic_conv2d.1} parent=0 // loop_header
    %s9 = sphi 0, %s13
    %p10 = scmp.ge.s32.totalorder %s9, 4
    %s16 = sphi 0, %s35
    %s17 = sphi 0, %s31
    %s18 = sphi 0, %s27
    %s19 = sphi 0, %s16
    %s20 = sphi 0, %s17
    %s21 = sphi 0, %s18
    %s22 = sphi 0, %s19
    %s23 = sphi 0, %s20
    %s24 = sphi 0, %s21
    %s38 = sphi 0, %s40
    %s41 = sphi 0, %s38
    %s42 = sphi 0, %s41
    %s58 = sphi 0, %s42
    %s64 = sphi 0, %s66
    %s67 = sphi 0, %s64
    %s68 = sphi 0, %s67
    %s84 = sphi 0, %s68
    %s90 = sphi 0, %s92
    %s93 = sphi 0, %s90
    %s94 = sphi 0, %s93
    %s110 = sphi 0, %s94
    %s120 = sphi 0, %s122
    %s123 = sphi 0, %s120
    %s124 = sphi 0, %s123
    %s140 = sphi 0, %s124
  $region4: #{basic_conv2d.1} parent=0 // loop_header_branch
    %12 = sbr.rel (%p10) target = $region8
  $region5: #{basic_conv2d.1} parent=0 // loop_body
    %s14 = ssub.s32 %s9, 1
    %s15 = ssub.s32 %s9, 2
    %s25 = sadd.s32 1, %s18
    %p26 = scmp.ge.s32.totalorder %s25, 1
    %s27 = scalar_select %p26, 0, %s25
    %s28 = sadd.s32 1, %s17
    %s29 = scalar_select %p26, %s28, %s17
    %p30 = scmp.ge.s32.totalorder %s29, 1
    %s31 = scalar_select %p30, 0, %s29
    %s32 = sadd.s32 1, %s16
    %s33 = scalar_select %p30, %s32, %s16
    %p34 = scmp.ge.s32.totalorder %s33, 2
    %s35 = scalar_select %p34, 0, %s33
    %s36 = ssub.s32 %s16, %s35
    %p37 = scmp.eq.s32.totalorder %s36, 0
    %s39 = sadd.s32 %s38, 1
    %s40 = scalar_select %p37, %s38, %s39
    %p43 = pneg %p37
    %p44 = scmp.eq.s32.totalorder %s9, 1
    %p45 = por %p43, %p44
    %p46 = scmp.ne.s32.totalorder %s38, %s41
    %p47 = scmp.eq.s32.totalorder %s9, 0
    %p48 = por %p46, %p47
    %p49 = scmp.ne.s32.totalorder %s38, %s41
    %p50 = scmp.eq.s32.totalorder %s14, 1
    %p51 = por %p49, %p50
    %p52 = scmp.ne.s32.totalorder %s41, %s42
    %p53 = scmp.eq.s32.totalorder %s14, 0
    %p54 = por %p52, %p53
    %p55 = scmp.ne.s32.totalorder %s41, %s42
    %p56 = scmp.eq.s32.totalorder %s15, 1
    %p57 = por %p55, %p56
    %p59 = scmp.ne.s32.totalorder %s42, %s58
    %p60 = scmp.eq.s32.totalorder %s15, 0
    %p61 = por %p59, %p60
    %s62 = ssub.s32 %s17, %s31
    %p63 = scmp.eq.s32.totalorder %s62, 0
    %s65 = sadd.s32 %s64, 1
    %s66 = scalar_select %p63, %s64, %s65
    %p69 = pneg %p63
    %p70 = scmp.eq.s32.totalorder %s9, 1
    %p71 = por %p69, %p70
    %p72 = scmp.ne.s32.totalorder %s64, %s67
    %p73 = scmp.eq.s32.totalorder %s9, 0
    %p74 = por %p72, %p73
    %p75 = scmp.ne.s32.totalorder %s64, %s67
    %p76 = scmp.eq.s32.totalorder %s14, 1
    %p77 = por %p75, %p76
    %p78 = scmp.ne.s32.totalorder %s67, %s68
    %p79 = scmp.eq.s32.totalorder %s14, 0
    %p80 = por %p78, %p79
    %p81 = scmp.ne.s32.totalorder %s67, %s68
    %p82 = scmp.eq.s32.totalorder %s15, 1
    %p83 = por %p81, %p82
    %p85 = scmp.ne.s32.totalorder %s68, %s84
    %p86 = scmp.eq.s32.totalorder %s15, 0
    %p87 = por %p85, %p86
    %s88 = ssub.s32 %s17, %s31
    %p89 = scmp.eq.s32.totalorder %s88, 0
    %s91 = sadd.s32 %s90, 1
    %s92 = scalar_select %p89, %s90, %s91
    %p95 = pneg %p89
    %p96 = scmp.eq.s32.totalorder %s9, 1
    %p97 = por %p95, %p96
    %p98 = scmp.ne.s32.totalorder %s90, %s93
    %p99 = scmp.eq.s32.totalorder %s9, 0
    %p100 = por %p98, %p99
    %p101 = scmp.ne.s32.totalorder %s90, %s93
    %p102 = scmp.eq.s32.totalorder %s14, 1
    %p103 = por %p101, %p102
    %p104 = scmp.ne.s32.totalorder %s93, %s94
    %p105 = scmp.eq.s32.totalorder %s14, 0
    %p106 = por %p104, %p105
    %p107 = scmp.ne.s32.totalorder %s93, %s94
    %p108 = scmp.eq.s32.totalorder %s15, 1
    %p109 = por %p107, %p108
    %p111 = scmp.ne.s32.totalorder %s94, %s110
    %p112 = scmp.eq.s32.totalorder %s15, 0
    %p113 = por %p111, %p112
    %s114 = ssub.s32 %s16, %s35
    %s115 = ssub.s32 %s18, %s27
    %s116 = sor.u32 %s114, %s115
    %s117 = ssub.s32 %s17, %s31
    %s118 = sor.u32 %s116, %s117
    %p119 = scmp.eq.s32.totalorder %s118, 0
    %s121 = sadd.s32 %s120, 1
    %s122 = scalar_select %p119, %s120, %s121
    %p125 = pneg %p119
    %p126 = scmp.eq.s32.totalorder %s9, 1
    %p127 = por %p125, %p126
    %p128 = scmp.ne.s32.totalorder %s120, %s123
    %p129 = scmp.eq.s32.totalorder %s9, 0
    %p130 = por %p128, %p129
    %p131 = scmp.ne.s32.totalorder %s120, %s123
    %p132 = scmp.eq.s32.totalorder %s14, 1
    %p133 = por %p131, %p132
    %p134 = scmp.ne.s32.totalorder %s123, %s124
    %p135 = scmp.eq.s32.totalorder %s14, 0
    %p136 = por %p134, %p135
    %p137 = scmp.ne.s32.totalorder %s123, %s124
    %p138 = scmp.eq.s32.totalorder %s15, 1
    %p139 = por %p137, %p138
    %p141 = scmp.ne.s32.totalorder %s124, %s140
    %p142 = scmp.eq.s32.totalorder %s15, 0
    %p143 = por %p141, %p142
    %p144 = scmp.le.s32.totalorder 1, %s9
    %p145 = scmp.lt.s32.totalorder %s9, 3
    %p146 = pnand %p144, %p145
    %p147 = pneg %p146
    // Predicated region
    $region9: #{basic_conv2d.1} parent=5 // pred_check
      _
    $region10: #{basic_conv2d.1} parent=5 // pred_check_branch
      %149 = sbr.rel (%p146) target = $region12
    $region11: #{basic_conv2d.1} parent=5 // pred_region
      %s150 = ssub.s32 %s9, 1
      // Predicated region
      $region13: #{basic_conv2d.1} parent=11 // pred_check
        %p151 = pneg %p80
      $region14: #{basic_conv2d.1} parent=11 // pred_check_branch
        %153 = sbr.rel (%p151) target = $region16
      $region15: #{basic_conv2d.1} parent=11 // pred_region
        %p154 = scmp.lt.s32.totalorder %s20, 0
        %s155 = scalar_select %p154, %s20, 0
        %s156 = smul.addr %s155, 2
        %s157 = scalar_lea.vmem %s1, %s156
      $region16: #{basic_conv2d.1} parent=11 // pred_fallthru
        _
      // Predicated region
      $region17: #{basic_conv2d.1} parent=11 // pred_check
        %p158 = pneg %p106
      $region18: #{basic_conv2d.1} parent=11 // pred_check_branch
        %160 = sbr.rel (%p158) target = $region20
      $region19: #{basic_conv2d.1} parent=11 // pred_region
        %p161 = scmp.lt.s32.totalorder %s20, 0
        %s162 = scalar_select %p161, %s20, 0
        %s163 = scalar_lea.vmem %s2, %s162
      $region20: #{basic_conv2d.1} parent=11 // pred_fallthru
        _
    $region12: #{basic_conv2d.1} parent=5 // pred_fallthru
      _
    %p164 = scmp.lt.s32.totalorder %s9, 2
    // Predicated region
    $region21: #{basic_conv2d.1} parent=5 // pred_check
      %p165 = pneg %p164
    $region22: #{basic_conv2d.1} parent=5 // pred_check_branch
      %167 = sbr.rel (%p165) target = $region24
    $region23: #{basic_conv2d.1} parent=5 // pred_region
      // Predicated region
      $region25: #{basic_conv2d.1} parent=23 // pred_check
        %p168 = pneg %p48
      $region26: #{basic_conv2d.1} parent=23 // pred_check_branch
        %170 = sbr.rel (%p168) target = $region28
      $region27: #{basic_conv2d.1} parent=23 // pred_region
        %p171 = scmp.lt.s32.totalorder %s16, 1
        %s172 = scalar_select %p171, %s16, 1
        %s173 = smul.addr %s172, 43
        %s174 = smul.addr %s173, 4
        %s175 = scalar_lea.vmem %s0, %s174
      $region28: #{basic_conv2d.1} parent=23 // pred_fallthru
        _
    $region24: #{basic_conv2d.1} parent=5 // pred_fallthru
      _
    %p176 = scmp.le.s32.totalorder 1, %s9
    %p177 = scmp.lt.s32.totalorder %s9, 3
    %p178 = pnand %p176, %p177
    %p179 = pneg %p178
    // Predicated region
    $region29: #{basic_conv2d.1} parent=5 // pred_check
      _
    $region30: #{basic_conv2d.1} parent=5 // pred_check_branch
      %181 = sbr.rel (%p178) target = $region32
    $region31: #{basic_conv2d.1} parent=5 // pred_region
      %s182 = ssub.s32 %s9, 1
      %p183 = scmp.lt.s32.totalorder %s19, 1
      %s184 = scalar_select %p183, %s19, 1
      %s185 = smul.addr %s184, 43
      %s186 = smul.addr %s185, 4
      %s187 = scalar_lea.vmem %s0, %s186
      %p188 = pneg %p54
      %p189 = pneg %p51
      %p190 = scmp.lt.s32.totalorder %s20, 0
      %s191 = scalar_select %p190, %s20, 0
      %s192 = smul.addr %s191, 2
      %s193 = scalar_lea.vmem %s1, %s192
      %p194 = pneg %p80
      %p195 = pneg %p77
      %p196 = scmp.lt.s32.totalorder %s20, 0
      %s197 = scalar_select %p196, %s20, 0
      %s198 = scalar_lea.vmem %s2, %s197
      %p199 = pneg %p106
      %p200 = pneg %p103
      %p201 = pneg %p136
      %p202 = pneg %p133
      %s203 = smul.u32 36, %s21
      %p204 = scmp.lt.s32.totalorder %s19, 1
      %s205 = scalar_select %p204, %s19, 1
      %p206 = scmp.lt.s32.totalorder %s203, 35
      %s207 = scalar_select %p206, %s203, 35
      %p208 = scmp.lt.s32.totalorder %s20, 0
      %s209 = scalar_select %p208, %s20, 0
      %s210 = sadd.s32 %s209, %s207
      %s211 = smul.addr %s205, 36
      %s212 = sadd.s32 %s210, %s211
      %s213 = smul.addr %s212, 8
      %s214 = scalar_lea.vmem %s3, %s213
      %p215 = scmp.lt.s32.totalorder %s19, 1
      %s216 = scalar_select %p215, %s19, 1
      %s217 = smul.addr %s216, 43
      %s218 = smul.addr %s217, 4
      %s219 = scalar_lea.vmem %s0, %s218
      %p220 = scmp.lt.s32.totalorder %s20, 0
      %s221 = scalar_select %p220, %s20, 0
      %s222 = smul.addr %s221, 2
      %s223 = scalar_lea.vmem %s1, %s222
      %p224 = scmp.lt.s32.totalorder %s20, 0
      %s225 = scalar_select %p224, %s20, 0
      %s226 = scalar_lea.vmem %s2, %s225
      %s227 = smul.u32 36, %s21
      %p228 = scmp.lt.s32.totalorder %s19, 1
      %s229 = scalar_select %p228, %s19, 1
      %p230 = scmp.lt.s32.totalorder %s227, 35
      %s231 = scalar_select %p230, %s227, 35
      %p232 = scmp.lt.s32.totalorder %s20, 0
      %s233 = scalar_select %p232, %s20, 0
      %s234 = sadd.s32 %s233, %s231
      %s235 = smul.addr %s229, 36
      %s236 = sadd.s32 %s234, %s235
      %s237 = smul.addr %s236, 8
      %s238 = scalar_lea.vmem %s3, %s237
      %s239 = smul.u32 36, %s21
      %s241 = smul.u32 %s21, 288
      %s242 = sshra.s32 %s241, 3
      %s243 = sand.u32 %s241, 7
      %s244 = smul.addr %s242, 4
      %s245 = scalar_lea.vmem %s219, %s244
      %v246 = vld [vmem:[%s245] sm:$0xf]
      %v247 = vld [vmem:[%s245 + $0x4] sm:$0xf]
      %v248 = vld [vmem:[%s245 + $0x8] sm:$0xf]
      %v249 = vld [vmem:[%s245 + $0xc] sm:$0xf]
      %v250 = vld [vmem:[%s245 + $0x10] sm:$0xf]
      %v251 = vld [vmem:[%s245 + $0x14] sm:$0xf]
      %v252 = vld [vmem:[%s245 + $0x18] sm:$0xf]
      %v253 = vld [vmem:[%s245 + $0x1c] sm:$0xf]
      %v254 = vld [vmem:[%s245 + $0x20] sm:$0xf]
      %v255 = vld [vmem:[%s245 + $0x24] sm:$0xf]
      %v256 = vld [vmem:[%s245 + $0x28] sm:$0xf]
      %v257 = vld [vmem:[%s245 + $0x2c] sm:$0xf]
      %v258 = vld [vmem:[%s245 + $0x30] sm:$0xf]
      %v259 = vld [vmem:[%s245 + $0x34] sm:$0xf]
      %v260 = vld [vmem:[%s245 + $0x38] sm:$0xf]
      %v261 = vld [vmem:[%s245 + $0x3c] sm:$0xf]
      %v262 = vld [vmem:[%s245 + $0x40] sm:$0xf]
      %v263 = vld [vmem:[%s245 + $0x44] sm:$0xf]
      %v264 = vld [vmem:[%s245 + $0x48] sm:$0xf]
      %v265 = vld [vmem:[%s245 + $0x4c] sm:$0xf]
      %v266 = vld [vmem:[%s245 + $0x50] sm:$0xf]
      %v267 = vld [vmem:[%s245 + $0x54] sm:$0xf]
      %v268 = vld [vmem:[%s245 + $0x58] sm:$0xf]
      %v269 = vld [vmem:[%s245 + $0x5c] sm:$0xf]
      %v270 = vld [vmem:[%s245 + $0x60] sm:$0xf]
      %v271 = vld [vmem:[%s245 + $0x64] sm:$0xf]
      %v272 = vld [vmem:[%s245 + $0x68] sm:$0xf]
      %v273 = vld [vmem:[%s245 + $0x6c] sm:$0xf]
      %v274 = vld [vmem:[%s245 + $0x70] sm:$0xf]
      %v275 = vld [vmem:[%s245 + $0x74] sm:$0xf]
      %v276 = vld [vmem:[%s245 + $0x78] sm:$0xf]
      %v277 = vld [vmem:[%s245 + $0x7c] sm:$0xf]
      %v278 = vld [vmem:[%s245 + $0x80] sm:$0xf]
      %v279 = vld [vmem:[%s245 + $0x84] sm:$0xf]
      %v280 = vld [vmem:[%s245 + $0x88] sm:$0xf]
      %v281 = vld [vmem:[%s245 + $0x8c] sm:$0xf]
      %v282 = vld [vmem:[%s245 + $0x90] sm:$0xf]
      %v283 = vld [vmem:[%s245 + $0x94] sm:$0xf]
      %v284 = vld [vmem:[%s245 + $0x98] sm:$0xf]
      %v285 = vld [vmem:[%s245 + $0x9c] sm:$0xf]
      %v286 = vld [vmem:[%s245 + $0xa0] sm:$0x7]
      %v287 = vld [vmem:[%s223] sm:$0x3]
      %s288 = scalar_lea.vmem %s223, 2
      %v289 = vld [vmem:[%s288] sm:$0x3]
      %v327 = vunpack.c.l.b16 %v246
      %v328 = vunpack.c.l.b16 %v247
      %v329 = vunpack.c.l.b16 %v248
      %v330 = vunpack.c.l.b16 %v249
      %v331 = vunpack.c.l.b16 %v250
      %v332 = vunpack.c.l.b16 %v251
      %v333 = vunpack.c.l.b16 %v252
      %v334 = vunpack.c.l.b16 %v253
      %v335 = vunpack.c.l.b16 %v254
      %v336 = vunpack.c.l.b16 %v255
      %v337 = vunpack.c.l.b16 %v256
      %v338 = vunpack.c.l.b16 %v257
      %v339 = vunpack.c.l.b16 %v258
      %v340 = vunpack.c.l.b16 %v259
      %v341 = vunpack.c.l.b16 %v260
      %v342 = vunpack.c.l.b16 %v261
      %v343 = vunpack.c.l.b16 %v262
      %v344 = vunpack.c.l.b16 %v263
      %v345 = vunpack.c.l.b16 %v264
      %v346 = vunpack.c.l.b16 %v265
      %v347 = vunpack.c.l.b16 %v266
      %v348 = vunpack.c.l.b16 %v267
      %v349 = vunpack.c.l.b16 %v268
      %v350 = vunpack.c.l.b16 %v269
      %v351 = vunpack.c.l.b16 %v270
      %v352 = vunpack.c.l.b16 %v271
      %v353 = vunpack.c.l.b16 %v272
      %v354 = vunpack.c.l.b16 %v273
      %v355 = vunpack.c.l.b16 %v274
      %v356 = vunpack.c.l.b16 %v275
      %v357 = vunpack.c.l.b16 %v276
      %v358 = vunpack.c.l.b16 %v277
      %v359 = vunpack.c.l.b16 %v278
      %v360 = vunpack.c.l.b16 %v279
      %v361 = vunpack.c.l.b16 %v280
      %v362 = vunpack.c.l.b16 %v281
      %v363 = vunpack.c.l.b16 %v282
      %v364 = vpack.c.b16 %v328, %v327
      %v365 = vpack.c.b16 %v330, %v329
      %v366 = vpack.c.b16 %v332, %v331
      %v367 = vpack.c.b16 %v334, %v333
      %v368 = vpack.c.b16 %v336, %v335
      %v369 = vpack.c.b16 %v338, %v337
      %v370 = vpack.c.b16 %v340, %v339
      %v371 = vpack.c.b16 %v342, %v341
      %v372 = vpack.c.b16 %v344, %v343
      %v373 = vpack.c.b16 %v346, %v345
      %v374 = vpack.c.b16 %v348, %v347
      %v375 = vpack.c.b16 %v350, %v349
      %v376 = vpack.c.b16 %v352, %v351
      %v377 = vpack.c.b16 %v354, %v353
      %v378 = vpack.c.b16 %v356, %v355
      %v379 = vpack.c.b16 %v358, %v357
      %v380 = vpack.c.b16 %v360, %v359
      %v381 = vpack.c.b16 %v362, %v361
      %v382 = vpack.c.b16 %v363, %v363
      %vm383 = vsmask.f32 7424
      %v385 = vshrl.u32 %v364, 16
      %v387 = vshll.u32 %v364, 16
      %v389 = vrot.slane %v387, 1
      %v390 = vor.u32 %v385, %v389
      %v392 = vshll.u32 %v365, 16
      %v394 = vrot.slane %v392, 1
      %v395 = vsel %vm383, %v390, %v394
      %v396 = vshrl.u32 %v365, 16
      %v398 = vor.u32 %v396, %v394
      %v400 = vshll.u32 %v366, 16
      %v402 = vrot.slane %v400, 1
      %v403 = vsel %vm383, %v398, %v402
      %v404 = vshrl.u32 %v366, 16
      %v406 = vor.u32 %v404, %v402
      %v408 = vshll.u32 %v367, 16
      %v410 = vrot.slane %v408, 1
      %v411 = vsel %vm383, %v406, %v410
      %v412 = vshrl.u32 %v367, 16
      %v414 = vor.u32 %v412, %v410
      %v416 = vshll.u32 %v368, 16
      %v418 = vrot.slane %v416, 1
      %v419 = vsel %vm383, %v414, %v418
      %v420 = vshrl.u32 %v368, 16
      %v422 = vor.u32 %v420, %v418
      %v424 = vshll.u32 %v369, 16
      %v426 = vrot.slane %v424, 1
      %v427 = vsel %vm383, %v422, %v426
      %v428 = vshrl.u32 %v369, 16
      %v430 = vor.u32 %v428, %v426
      %v432 = vshll.u32 %v370, 16
      %v434 = vrot.slane %v432, 1
      %v435 = vsel %vm383, %v430, %v434
      %v436 = vshrl.u32 %v370, 16
      %v438 = vor.u32 %v436, %v434
      %v440 = vshll.u32 %v371, 16
      %v442 = vrot.slane %v440, 1
      %v443 = vsel %vm383, %v438, %v442
      %v444 = vshrl.u32 %v371, 16
      %v446 = vor.u32 %v444, %v442
      %v448 = vshll.u32 %v372, 16
      %v450 = vrot.slane %v448, 1
      %v451 = vsel %vm383, %v446, %v450
      %v452 = vshrl.u32 %v372, 16
      %v454 = vor.u32 %v452, %v450
      %v456 = vshll.u32 %v373, 16
      %v458 = vrot.slane %v456, 1
      %v459 = vsel %vm383, %v454, %v458
      %v460 = vshrl.u32 %v373, 16
      %v462 = vor.u32 %v460, %v458
      %v464 = vshll.u32 %v374, 16
      %v466 = vrot.slane %v464, 1
      %v467 = vsel %vm383, %v462, %v466
      %v468 = vshrl.u32 %v374, 16
      %v470 = vor.u32 %v468, %v466
      %v472 = vshll.u32 %v375, 16
      %v474 = vrot.slane %v472, 1
      %v475 = vsel %vm383, %v470, %v474
      %v476 = vshrl.u32 %v375, 16
      %v478 = vor.u32 %v476, %v474
      %v480 = vshll.u32 %v376, 16
      %v482 = vrot.slane %v480, 1
      %v483 = vsel %vm383, %v478, %v482
      %v484 = vshrl.u32 %v376, 16
      %v486 = vor.u32 %v484, %v482
      %v488 = vshll.u32 %v377, 16
      %v490 = vrot.slane %v488, 1
      %v491 = vsel %vm383, %v486, %v490
      %v492 = vshrl.u32 %v377, 16
      %v494 = vor.u32 %v492, %v490
      %v496 = vshll.u32 %v378, 16
      %v498 = vrot.slane %v496, 1
      %v499 = vsel %vm383, %v494, %v498
      %v500 = vshrl.u32 %v378, 16
      %v502 = vor.u32 %v500, %v498
      %v504 = vshll.u32 %v379, 16
      %v506 = vrot.slane %v504, 1
      %v507 = vsel %vm383, %v502, %v506
      %v508 = vshrl.u32 %v379, 16
      %v510 = vor.u32 %v508, %v506
      %v512 = vshll.u32 %v380, 16
      %v514 = vrot.slane %v512, 1
      %v515 = vsel %vm383, %v510, %v514
      %v516 = vshrl.u32 %v380, 16
      %v518 = vor.u32 %v516, %v514
      %v520 = vshll.u32 %v381, 16
      %v522 = vrot.slane %v520, 1
      %v523 = vsel %vm383, %v518, %v522
      %v524 = vshrl.u32 %v381, 16
      %v526 = vor.u32 %v524, %v522
      %v528 = vshll.u32 %v382, 16
      %v530 = vrot.slane %v528, 1
      %v531 = vsel %vm383, %v526, %v530
      %vm532 = vcmask 31744
      %v534 = vsel %vm532, %v395, 0
      %v537 = vsel %vm532, %v403, 0
      %v540 = vsel %vm532, %v411, 0
      %v543 = vsel %vm532, %v419, 0
      %v546 = vsel %vm532, %v427, 0
      %v549 = vsel %vm532, %v435, 0
      %v552 = vsel %vm532, %v443, 0
      %v555 = vsel %vm532, %v451, 0
      %v558 = vsel %vm532, %v459, 0
      %v561 = vsel %vm532, %v467, 0
      %v564 = vsel %vm532, %v475, 0
      %v567 = vsel %vm532, %v483, 0
      %v570 = vsel %vm532, %v491, 0
      %v573 = vsel %vm532, %v499, 0
      %v576 = vsel %vm532, %v507, 0
      %v579 = vsel %vm532, %v515, 0
      %v582 = vsel %vm532, %v523, 0
      %v585 = vsel %vm532, %v531, 0
      %vm587 = vcmask 1041408
      %v589 = vsel %vm587, %v289, 0
      %591 = vmatpush.bf16.msra.mxu0 0
      %592 = vmatpush.bf16.msra.mxu0 0
      %593 = vmatpush.bf16.msra.mxu0 0
      %594 = vmatpush.bf16.msra.mxu0 0
      %595 = vmatpush.bf16.msra.mxu0 0
      %596 = vmatpush.bf16.msra.mxu0 0
      %597 = vmatpush.bf16.msra.mxu0 0
      %598 = vmatpush.bf16.msra.mxu0 %v589
      %599 = vmatmul.bf16.gmra.mxu0 %v534
      %v600 = vpop.f32.mrf.mxu0
      %v601 = vadd.f32 0.0, %v600
      %v602 = vpop.f32.mrf.mxu0
      %v603 = vadd.f32 0.0, %v602
      %604 = vmatmul.bf16.gmra.mxu0 %v537
      %v605 = vpop.f32.mrf.mxu0
      %v606 = vadd.f32 0.0, %v605
      %v607 = vpop.f32.mrf.mxu0
      %v608 = vadd.f32 0.0, %v607
      %609 = vmatmul.bf16.gmra.mxu0 %v540
      %v610 = vpop.f32.mrf.mxu0
      %v611 = vadd.f32 0.0, %v610
      %v612 = vpop.f32.mrf.mxu0
      %v613 = vadd.f32 0.0, %v612
      %614 = vmatmul.bf16.gmra.mxu0 %v543
      %v615 = vpop.f32.mrf.mxu0
      %v616 = vadd.f32 0.0, %v615
      %v617 = vpop.f32.mrf.mxu0
      %v618 = vadd.f32 0.0, %v617
      %619 = vmatmul.bf16.gmra.mxu0 %v546
      %v620 = vpop.f32.mrf.mxu0
      %v621 = vadd.f32 0.0, %v620
      %v622 = vpop.f32.mrf.mxu0
      %v623 = vadd.f32 0.0, %v622
      %624 = vmatmul.bf16.gmra.mxu0 %v549
      %v625 = vpop.f32.mrf.mxu0
      %v626 = vadd.f32 0.0, %v625
      %v627 = vpop.f32.mrf.mxu0
      %v628 = vadd.f32 0.0, %v627
      %629 = vmatmul.bf16.gmra.mxu0 %v552
      %v630 = vpop.f32.mrf.mxu0
      %v631 = vadd.f32 0.0, %v630
      %v632 = vpop.f32.mrf.mxu0
      %v633 = vadd.f32 0.0, %v632
      %634 = vmatmul.bf16.gmra.mxu0 %v555
      %v635 = vpop.f32.mrf.mxu0
      %v636 = vadd.f32 0.0, %v635
      %v637 = vpop.f32.mrf.mxu0
      %v638 = vadd.f32 0.0, %v637
      %639 = vmatmul.bf16.gmra.mxu0 %v558
      %v640 = vpop.f32.mrf.mxu0
      %v641 = vadd.f32 0.0, %v640
      %v642 = vpop.f32.mrf.mxu0
      %v643 = vadd.f32 0.0, %v642
      %644 = vmatmul.bf16.gmra.mxu0 %v561
      %v645 = vpop.f32.mrf.mxu0
      %v646 = vadd.f32 0.0, %v645
      %v647 = vpop.f32.mrf.mxu0
      %v648 = vadd.f32 0.0, %v647
      %649 = vmatmul.bf16.gmra.mxu0 %v564
      %v650 = vpop.f32.mrf.mxu0
      %v651 = vadd.f32 0.0, %v650
      %v652 = vpop.f32.mrf.mxu0
      %v653 = vadd.f32 0.0, %v652
      %654 = vmatmul.bf16.gmra.mxu0 %v567
      %v655 = vpop.f32.mrf.mxu0
      %v656 = vadd.f32 0.0, %v655
      %v657 = vpop.f32.mrf.mxu0
      %v658 = vadd.f32 0.0, %v657
      %659 = vmatmul.bf16.gmra.mxu0 %v570
      %v660 = vpop.f32.mrf.mxu0
      %v661 = vadd.f32 0.0, %v660
      %v662 = vpop.f32.mrf.mxu0
      %v663 = vadd.f32 0.0, %v662
      %664 = vmatmul.bf16.gmra.mxu0 %v573
      %v665 = vpop.f32.mrf.mxu0
      %v666 = vadd.f32 0.0, %v665
      %v667 = vpop.f32.mrf.mxu0
      %v668 = vadd.f32 0.0, %v667
      %669 = vmatmul.bf16.gmra.mxu0 %v576
      %v670 = vpop.f32.mrf.mxu0
      %v671 = vadd.f32 0.0, %v670
      %v672 = vpop.f32.mrf.mxu0
      %v673 = vadd.f32 0.0, %v672
      %674 = vmatmul.bf16.gmra.mxu0 %v579
      %v675 = vpop.f32.mrf.mxu0
      %v676 = vadd.f32 0.0, %v675
      %v677 = vpop.f32.mrf.mxu0
      %v678 = vadd.f32 0.0, %v677
      %679 = vmatmul.bf16.gmra.mxu0 %v582
      %v680 = vpop.f32.mrf.mxu0
      %v681 = vadd.f32 0.0, %v680
      %v682 = vpop.f32.mrf.mxu0
      %v683 = vadd.f32 0.0, %v682
      %684 = vmatmul.bf16.gmra.mxu0 %v585
      %v685 = vpop.f32.mrf.mxu0
      %v686 = vadd.f32 0.0, %v685
      %v687 = vpop.f32.mrf.mxu0
      %v688 = vadd.f32 0.0, %v687
      %689 = vdwg.mxu0
      %v690 = vsel %vm532, %v364, 0
      %v692 = vsel %vm532, %v365, 0
      %v694 = vsel %vm532, %v366, 0
      %v696 = vsel %vm532, %v367, 0
      %v698 = vsel %vm532, %v368, 0
      %v700 = vsel %vm532, %v369, 0
      %v702 = vsel %vm532, %v370, 0
      %v704 = vsel %vm532, %v371, 0
      %v706 = vsel %vm532, %v372, 0
      %v708 = vsel %vm532, %v373, 0
      %v710 = vsel %vm532, %v374, 0
      %v712 = vsel %vm532, %v375, 0
      %v714 = vsel %vm532, %v376, 0
      %v716 = vsel %vm532, %v377, 0
      %v718 = vsel %vm532, %v378, 0
      %v720 = vsel %vm532, %v379, 0
      %v722 = vsel %vm532, %v380, 0
      %v724 = vsel %vm532, %v381, 0
      %v727 = vsel %vm587, %v287, 0
      %729 = vmatpush.bf16.msra.mxu0 0
      %730 = vmatpush.bf16.msra.mxu0 0
      %731 = vmatpush.bf16.msra.mxu0 0
      %732 = vmatpush.bf16.msra.mxu0 0
      %733 = vmatpush.bf16.msra.mxu0 0
      %734 = vmatpush.bf16.msra.mxu0 0
      %735 = vmatpush.bf16.msra.mxu0 0
      %736 = vmatpush.bf16.msra.mxu0 %v727
      %737 = vmatmul.bf16.gmra.mxu0 %v690
      %v738 = vpop.f32.mrf.mxu0
      %v739 = vadd.f32 %v601, %v738
      %v740 = vpop.f32.mrf.mxu0
      %v741 = vadd.f32 %v603, %v740
      %742 = vmatmul.bf16.gmra.mxu0 %v692
      %v743 = vpop.f32.mrf.mxu0
      %v744 = vadd.f32 %v606, %v743
      %v745 = vpop.f32.mrf.mxu0
      %v746 = vadd.f32 %v608, %v745
      %747 = vmatmul.bf16.gmra.mxu0 %v694
      %v748 = vpop.f32.mrf.mxu0
      %v749 = vadd.f32 %v611, %v748
      %v750 = vpop.f32.mrf.mxu0
      %v751 = vadd.f32 %v613, %v750
      %752 = vmatmul.bf16.gmra.mxu0 %v696
      %v753 = vpop.f32.mrf.mxu0
      %v754 = vadd.f32 %v616, %v753
      %v755 = vpop.f32.mrf.mxu0
      %v756 = vadd.f32 %v618, %v755
      %757 = vmatmul.bf16.gmra.mxu0 %v698
      %v758 = vpop.f32.mrf.mxu0
      %v759 = vadd.f32 %v621, %v758
      %v760 = vpop.f32.mrf.mxu0
      %v761 = vadd.f32 %v623, %v760
      %762 = vmatmul.bf16.gmra.mxu0 %v700
      %v763 = vpop.f32.mrf.mxu0
      %v764 = vadd.f32 %v626, %v763
      %v765 = vpop.f32.mrf.mxu0
      %v766 = vadd.f32 %v628, %v765
      %767 = vmatmul.bf16.gmra.mxu0 %v702
      %v768 = vpop.f32.mrf.mxu0
      %v769 = vadd.f32 %v631, %v768
      %v770 = vpop.f32.mrf.mxu0
      %v771 = vadd.f32 %v633, %v770
      %772 = vmatmul.bf16.gmra.mxu0 %v704
      %v773 = vpop.f32.mrf.mxu0
      %v774 = vadd.f32 %v636, %v773
      %v775 = vpop.f32.mrf.mxu0
      %v776 = vadd.f32 %v638, %v775
      %777 = vmatmul.bf16.gmra.mxu0 %v706
      %v778 = vpop.f32.mrf.mxu0
      %v779 = vadd.f32 %v641, %v778
      %v780 = vpop.f32.mrf.mxu0
      %v781 = vadd.f32 %v643, %v780
      %782 = vmatmul.bf16.gmra.mxu0 %v708
      %v783 = vpop.f32.mrf.mxu0
      %v784 = vadd.f32 %v646, %v783
      %v785 = vpop.f32.mrf.mxu0
      %v786 = vadd.f32 %v648, %v785
      %787 = vmatmul.bf16.gmra.mxu0 %v710
      %v788 = vpop.f32.mrf.mxu0
      %v789 = vadd.f32 %v651, %v788
      %v790 = vpop.f32.mrf.mxu0
      %v791 = vadd.f32 %v653, %v790
      %792 = vmatmul.bf16.gmra.mxu0 %v712
      %v793 = vpop.f32.mrf.mxu0
      %v794 = vadd.f32 %v656, %v793
      %v795 = vpop.f32.mrf.mxu0
      %v796 = vadd.f32 %v658, %v795
      %797 = vmatmul.bf16.gmra.mxu0 %v714
      %v798 = vpop.f32.mrf.mxu0
      %v799 = vadd.f32 %v661, %v798
      %v800 = vpop.f32.mrf.mxu0
      %v801 = vadd.f32 %v663, %v800
      %802 = vmatmul.bf16.gmra.mxu0 %v716
      %v803 = vpop.f32.mrf.mxu0
      %v804 = vadd.f32 %v666, %v803
      %v805 = vpop.f32.mrf.mxu0
      %v806 = vadd.f32 %v668, %v805
      %807 = vmatmul.bf16.gmra.mxu0 %v718
      %v808 = vpop.f32.mrf.mxu0
      %v809 = vadd.f32 %v671, %v808
      %v810 = vpop.f32.mrf.mxu0
      %v811 = vadd.f32 %v673, %v810
      %812 = vmatmul.bf16.gmra.mxu0 %v720
      %v813 = vpop.f32.mrf.mxu0
      %v814 = vadd.f32 %v676, %v813
      %v815 = vpop.f32.mrf.mxu0
      %v816 = vadd.f32 %v678, %v815
      %817 = vmatmul.bf16.gmra.mxu0 %v722
      %v818 = vpop.f32.mrf.mxu0
      %v819 = vadd.f32 %v681, %v818
      %v820 = vpop.f32.mrf.mxu0
      %v821 = vadd.f32 %v683, %v820
      %822 = vmatmul.bf16.gmra.mxu0 %v724
      %v823 = vpop.f32.mrf.mxu0
      %v824 = vadd.f32 %v686, %v823
      %v825 = vpop.f32.mrf.mxu0
      %v826 = vadd.f32 %v688, %v825
      %827 = vdwg.mxu0
      %s828 = scalar_lea.vmem %s223, 4
      %v829 = vld [vmem:[%s828] sm:$0x3]
      %vm830 = vcmask 1046528
      %v831 = vrot.slane %v364, 1
      %v832 = vrot.slane %v365, 1
      %v833 = vsel %vm830, %v831, %v832
      %v834 = vrot.slane %v366, 1
      %v835 = vsel %vm830, %v832, %v834
      %v836 = vrot.slane %v367, 1
      %v837 = vsel %vm830, %v834, %v836
      %v838 = vrot.slane %v368, 1
      %v839 = vsel %vm830, %v836, %v838
      %v840 = vrot.slane %v369, 1
      %v841 = vsel %vm830, %v838, %v840
      %v842 = vrot.slane %v370, 1
      %v843 = vsel %vm830, %v840, %v842
      %v844 = vrot.slane %v371, 1
      %v845 = vsel %vm830, %v842, %v844
      %v846 = vrot.slane %v372, 1
      %v847 = vsel %vm830, %v844, %v846
      %v848 = vrot.slane %v373, 1
      %v849 = vsel %vm830, %v846, %v848
      %v850 = vrot.slane %v374, 1
      %v851 = vsel %vm830, %v848, %v850
      %v852 = vrot.slane %v375, 1
      %v853 = vsel %vm830, %v850, %v852
      %v854 = vrot.slane %v376, 1
      %v855 = vsel %vm830, %v852, %v854
      %v856 = vrot.slane %v377, 1
      %v857 = vsel %vm830, %v854, %v856
      %v858 = vrot.slane %v378, 1
      %v859 = vsel %vm830, %v856, %v858
      %v860 = vrot.slane %v379, 1
      %v861 = vsel %vm830, %v858, %v860
      %v862 = vrot.slane %v380, 1
      %v863 = vsel %vm830, %v860, %v862
      %v864 = vrot.slane %v381, 1
      %v865 = vsel %vm830, %v862, %v864
      %v866 = vrot.slane %v382, 1
      %v867 = vsel %vm830, %v864, %v866
      %v869 = vsel %vm532, %v833, 0
      %v872 = vsel %vm532, %v835, 0
      %v875 = vsel %vm532, %v837, 0
      %v878 = vsel %vm532, %v839, 0
      %v881 = vsel %vm532, %v841, 0
      %v884 = vsel %vm532, %v843, 0
      %v887 = vsel %vm532, %v845, 0
      %v890 = vsel %vm532, %v847, 0
      %v893 = vsel %vm532, %v849, 0
      %v896 = vsel %vm532, %v851, 0
      %v899 = vsel %vm532, %v853, 0
      %v902 = vsel %vm532, %v855, 0
      %v905 = vsel %vm532, %v857, 0
      %v908 = vsel %vm532, %v859, 0
      %v911 = vsel %vm532, %v861, 0
      %v914 = vsel %vm532, %v863, 0
      %v917 = vsel %vm532, %v865, 0
      %v920 = vsel %vm532, %v867, 0
      %v923 = vsel %vm587, %v829, 0
      %925 = vmatpush.bf16.msra.mxu0 0
      %926 = vmatpush.bf16.msra.mxu0 0
      %927 = vmatpush.bf16.msra.mxu0 0
      %928 = vmatpush.bf16.msra.mxu0 0
      %929 = vmatpush.bf16.msra.mxu0 0
      %930 = vmatpush.bf16.msra.mxu0 0
      %931 = vmatpush.bf16.msra.mxu0 0
      %932 = vmatpush.bf16.msra.mxu0 %v923
      %933 = vmatmul.bf16.gmra.mxu0 %v869
      %v934 = vpop.f32.mrf.mxu0
      %v935 = vadd.f32 0.0, %v934
      %v936 = vpop.f32.mrf.mxu0
      %v937 = vadd.f32 0.0, %v936
      %938 = vmatmul.bf16.gmra.mxu0 %v872
      %v939 = vpop.f32.mrf.mxu0
      %v940 = vadd.f32 0.0, %v939
      %v941 = vpop.f32.mrf.mxu0
      %v942 = vadd.f32 0.0, %v941
      %943 = vmatmul.bf16.gmra.mxu0 %v875
      %v944 = vpop.f32.mrf.mxu0
      %v945 = vadd.f32 0.0, %v944
      %v946 = vpop.f32.mrf.mxu0
      %v947 = vadd.f32 0.0, %v946
      %948 = vmatmul.bf16.gmra.mxu0 %v878
      %v949 = vpop.f32.mrf.mxu0
      %v950 = vadd.f32 0.0, %v949
      %v951 = vpop.f32.mrf.mxu0
      %v952 = vadd.f32 0.0, %v951
      %953 = vmatmul.bf16.gmra.mxu0 %v881
      %v954 = vpop.f32.mrf.mxu0
      %v955 = vadd.f32 0.0, %v954
      %v956 = vpop.f32.mrf.mxu0
      %v957 = vadd.f32 0.0, %v956
      %958 = vmatmul.bf16.gmra.mxu0 %v884
      %v959 = vpop.f32.mrf.mxu0
      %v960 = vadd.f32 0.0, %v959
      %v961 = vpop.f32.mrf.mxu0
      %v962 = vadd.f32 0.0, %v961
      %963 = vmatmul.bf16.gmra.mxu0 %v887
      %v964 = vpop.f32.mrf.mxu0
      %v965 = vadd.f32 0.0, %v964
      %v966 = vpop.f32.mrf.mxu0
      %v967 = vadd.f32 0.0, %v966
      %968 = vmatmul.bf16.gmra.mxu0 %v890
      %v969 = vpop.f32.mrf.mxu0
      %v970 = vadd.f32 0.0, %v969
      %v971 = vpop.f32.mrf.mxu0
      %v972 = vadd.f32 0.0, %v971
      %973 = vmatmul.bf16.gmra.mxu0 %v893
      %v974 = vpop.f32.mrf.mxu0
      %v975 = vadd.f32 0.0, %v974
      %v976 = vpop.f32.mrf.mxu0
      %v977 = vadd.f32 0.0, %v976
      %978 = vmatmul.bf16.gmra.mxu0 %v896
      %v979 = vpop.f32.mrf.mxu0
      %v980 = vadd.f32 0.0, %v979
      %v981 = vpop.f32.mrf.mxu0
      %v982 = vadd.f32 0.0, %v981
      %983 = vmatmul.bf16.gmra.mxu0 %v899
      %v984 = vpop.f32.mrf.mxu0
      %v985 = vadd.f32 0.0, %v984
      %v986 = vpop.f32.mrf.mxu0
      %v987 = vadd.f32 0.0, %v986
      %988 = vmatmul.bf16.gmra.mxu0 %v902
      %v989 = vpop.f32.mrf.mxu0
      %v990 = vadd.f32 0.0, %v989
      %v991 = vpop.f32.mrf.mxu0
      %v992 = vadd.f32 0.0, %v991
      %993 = vmatmul.bf16.gmra.mxu0 %v905
      %v994 = vpop.f32.mrf.mxu0
      %v995 = vadd.f32 0.0, %v994
      %v996 = vpop.f32.mrf.mxu0
      %v997 = vadd.f32 0.0, %v996
      %998 = vmatmul.bf16.gmra.mxu0 %v908
      %v999 = vpop.f32.mrf.mxu0
      %v1000 = vadd.f32 0.0, %v999
      %v1001 = vpop.f32.mrf.mxu0
      %v1002 = vadd.f32 0.0, %v1001
      %1003 = vmatmul.bf16.gmra.mxu0 %v911
      %v1004 = vpop.f32.mrf.mxu0
      %v1005 = vadd.f32 0.0, %v1004
      %v1006 = vpop.f32.mrf.mxu0
      %v1007 = vadd.f32 0.0, %v1006
      %1008 = vmatmul.bf16.gmra.mxu0 %v914
      %v1009 = vpop.f32.mrf.mxu0
      %v1010 = vadd.f32 0.0, %v1009
      %v1011 = vpop.f32.mrf.mxu0
      %v1012 = vadd.f32 0.0, %v1011
      %1013 = vmatmul.bf16.gmra.mxu0 %v917
      %v1014 = vpop.f32.mrf.mxu0
      %v1015 = vadd.f32 0.0, %v1014
      %v1016 = vpop.f32.mrf.mxu0
      %v1017 = vadd.f32 0.0, %v1016
      %1018 = vmatmul.bf16.gmra.mxu0 %v920
      %v1019 = vpop.f32.mrf.mxu0
      %v1020 = vadd.f32 0.0, %v1019
      %v1021 = vpop.f32.mrf.mxu0
      %v1022 = vadd.f32 0.0, %v1021
      %1023 = vdwg.mxu0
      %v1024 = vadd.f32 %v739, %v935
      %v1025 = vadd.f32 %v741, %v937
      %v1026 = vadd.f32 %v744, %v940
      %v1027 = vadd.f32 %v746, %v942
      %v1028 = vadd.f32 %v749, %v945
      %v1029 = vadd.f32 %v751, %v947
      %v1030 = vadd.f32 %v754, %v950
      %v1031 = vadd.f32 %v756, %v952
      %v1032 = vadd.f32 %v759, %v955
      %v1033 = vadd.f32 %v761, %v957
      %v1034 = vadd.f32 %v764, %v960
      %v1035 = vadd.f32 %v766, %v962
      %v1036 = vadd.f32 %v769, %v965
      %v1037 = vadd.f32 %v771, %v967
      %v1038 = vadd.f32 %v774, %v970
      %v1039 = vadd.f32 %v776, %v972
      %v1040 = vadd.f32 %v779, %v975
      %v1041 = vadd.f32 %v781, %v977
      %v1042 = vadd.f32 %v784, %v980
      %v1043 = vadd.f32 %v786, %v982
      %v1044 = vadd.f32 %v789, %v985
      %v1045 = vadd.f32 %v791, %v987
      %v1046 = vadd.f32 %v794, %v990
      %v1047 = vadd.f32 %v796, %v992
      %v1048 = vadd.f32 %v799, %v995
      %v1049 = vadd.f32 %v801, %v997
      %v1050 = vadd.f32 %v804, %v1000
      %v1051 = vadd.f32 %v806, %v1002
      %v1052 = vadd.f32 %v809, %v1005
      %v1053 = vadd.f32 %v811, %v1007
      %v1054 = vadd.f32 %v814, %v1010
      %v1055 = vadd.f32 %v816, %v1012
      %v1056 = vadd.f32 %v819, %v1015
      %v1057 = vadd.f32 %v821, %v1017
      %v1058 = vadd.f32 %v824, %v1020
      %v1059 = vadd.f32 %v826, %v1022
      %s1060 = scalar_lea.vmem %s223, 6
      %v1061 = vld [vmem:[%s1060] sm:$0x3]
      %v1064 = vunpack.c.l.b16 %v283
      %v1065 = vunpack.c.l.b16 %v284
      %v1066 = vpack.c.b16 %v1064, %v363
      %v1067 = vpack.c.b16 %v1065, %v1065
      %v1068 = vrot.slane %v1066, 1
      %v1069 = vsel %vm830, %v864, %v1068
      %v1070 = vrot.slane %v1067, 1
      %v1071 = vsel %vm830, %v1068, %v1070
      %v1073 = vsel %vm532, %v1069, 0
      %v1076 = vsel %vm532, %v1071, 0
      %v1079 = vsel %vm587, %v1061, 0
      %1081 = vmatpush.bf16.msra.mxu0 0
      %1082 = vmatpush.bf16.msra.mxu0 0
      %1083 = vmatpush.bf16.msra.mxu0 0
      %1084 = vmatpush.bf16.msra.mxu0 0
      %1085 = vmatpush.bf16.msra.mxu0 0
      %1086 = vmatpush.bf16.msra.mxu0 0
      %1087 = vmatpush.bf16.msra.mxu0 0
      %1088 = vmatpush.bf16.msra.mxu0 %v1079
      %1089 = vmatmul.bf16.gmra.mxu0 %v872
      %v1090 = vpop.f32.mrf.mxu0
      %v1091 = vadd.f32 0.0, %v1090
      %v1092 = vpop.f32.mrf.mxu0
      %v1093 = vadd.f32 0.0, %v1092
      %1094 = vmatmul.bf16.gmra.mxu0 %v875
      %v1095 = vpop.f32.mrf.mxu0
      %v1096 = vadd.f32 0.0, %v1095
      %v1097 = vpop.f32.mrf.mxu0
      %v1098 = vadd.f32 0.0, %v1097
      %1099 = vmatmul.bf16.gmra.mxu0 %v878
      %v1100 = vpop.f32.mrf.mxu0
      %v1101 = vadd.f32 0.0, %v1100
      %v1102 = vpop.f32.mrf.mxu0
      %v1103 = vadd.f32 0.0, %v1102
      %1104 = vmatmul.bf16.gmra.mxu0 %v881
      %v1105 = vpop.f32.mrf.mxu0
      %v1106 = vadd.f32 0.0, %v1105
      %v1107 = vpop.f32.mrf.mxu0
      %v1108 = vadd.f32 0.0, %v1107
      %1109 = vmatmul.bf16.gmra.mxu0 %v884
      %v1110 = vpop.f32.mrf.mxu0
      %v1111 = vadd.f32 0.0, %v1110
      %v1112 = vpop.f32.mrf.mxu0
      %v1113 = vadd.f32 0.0, %v1112
      %1114 = vmatmul.bf16.gmra.mxu0 %v887
      %v1115 = vpop.f32.mrf.mxu0
      %v1116 = vadd.f32 0.0, %v1115
      %v1117 = vpop.f32.mrf.mxu0
      %v1118 = vadd.f32 0.0, %v1117
      %1119 = vmatmul.bf16.gmra.mxu0 %v890
      %v1120 = vpop.f32.mrf.mxu0
      %v1121 = vadd.f32 0.0, %v1120
      %v1122 = vpop.f32.mrf.mxu0
      %v1123 = vadd.f32 0.0, %v1122
      %1124 = vmatmul.bf16.gmra.mxu0 %v893
      %v1125 = vpop.f32.mrf.mxu0
      %v1126 = vadd.f32 0.0, %v1125
      %v1127 = vpop.f32.mrf.mxu0
      %v1128 = vadd.f32 0.0, %v1127
      %1129 = vmatmul.bf16.gmra.mxu0 %v896
      %v1130 = vpop.f32.mrf.mxu0
      %v1131 = vadd.f32 0.0, %v1130
      %v1132 = vpop.f32.mrf.mxu0
      %v1133 = vadd.f32 0.0, %v1132
      %1134 = vmatmul.bf16.gmra.mxu0 %v899
      %v1135 = vpop.f32.mrf.mxu0
      %v1136 = vadd.f32 0.0, %v1135
      %v1137 = vpop.f32.mrf.mxu0
      %v1138 = vadd.f32 0.0, %v1137
      %1139 = vmatmul.bf16.gmra.mxu0 %v902
      %v1140 = vpop.f32.mrf.mxu0
      %v1141 = vadd.f32 0.0, %v1140
      %v1142 = vpop.f32.mrf.mxu0
      %v1143 = vadd.f32 0.0, %v1142
      %1144 = vmatmul.bf16.gmra.mxu0 %v905
      %v1145 = vpop.f32.mrf.mxu0
      %v1146 = vadd.f32 0.0, %v1145
      %v1147 = vpop.f32.mrf.mxu0
      %v1148 = vadd.f32 0.0, %v1147
      %1149 = vmatmul.bf16.gmra.mxu0 %v908
      %v1150 = vpop.f32.mrf.mxu0
      %v1151 = vadd.f32 0.0, %v1150
      %v1152 = vpop.f32.mrf.mxu0
      %v1153 = vadd.f32 0.0, %v1152
      %1154 = vmatmul.bf16.gmra.mxu0 %v911
      %v1155 = vpop.f32.mrf.mxu0
      %v1156 = vadd.f32 0.0, %v1155
      %v1157 = vpop.f32.mrf.mxu0
      %v1158 = vadd.f32 0.0, %v1157
      %1159 = vmatmul.bf16.gmra.mxu0 %v914
      %v1160 = vpop.f32.mrf.mxu0
      %v1161 = vadd.f32 0.0, %v1160
      %v1162 = vpop.f32.mrf.mxu0
      %v1163 = vadd.f32 0.0, %v1162
      %1164 = vmatmul.bf16.gmra.mxu0 %v917
      %v1165 = vpop.f32.mrf.mxu0
      %v1166 = vadd.f32 0.0, %v1165
      %v1167 = vpop.f32.mrf.mxu0
      %v1168 = vadd.f32 0.0, %v1167
      %1169 = vmatmul.bf16.gmra.mxu0 %v1073
      %v1170 = vpop.f32.mrf.mxu0
      %v1171 = vadd.f32 0.0, %v1170
      %v1172 = vpop.f32.mrf.mxu0
      %v1173 = vadd.f32 0.0, %v1172
      %1174 = vmatmul.bf16.gmra.mxu0 %v1076
      %v1175 = vpop.f32.mrf.mxu0
      %v1176 = vadd.f32 0.0, %v1175
      %v1177 = vpop.f32.mrf.mxu0
      %v1178 = vadd.f32 0.0, %v1177
      %1179 = vdwg.mxu0
      %v1180 = vadd.f32 %v1024, %v1091
      %v1181 = vadd.f32 %v1025, %v1093
      %v1182 = vadd.f32 %v1026, %v1096
      %v1183 = vadd.f32 %v1027, %v1098
      %v1184 = vadd.f32 %v1028, %v1101
      %v1185 = vadd.f32 %v1029, %v1103
      %v1186 = vadd.f32 %v1030, %v1106
      %v1187 = vadd.f32 %v1031, %v1108
      %v1188 = vadd.f32 %v1032, %v1111
      %v1189 = vadd.f32 %v1033, %v1113
      %v1190 = vadd.f32 %v1034, %v1116
      %v1191 = vadd.f32 %v1035, %v1118
      %v1192 = vadd.f32 %v1036, %v1121
      %v1193 = vadd.f32 %v1037, %v1123
      %v1194 = vadd.f32 %v1038, %v1126
      %v1195 = vadd.f32 %v1039, %v1128
      %v1196 = vadd.f32 %v1040, %v1131
      %v1197 = vadd.f32 %v1041, %v1133
      %v1198 = vadd.f32 %v1042, %v1136
      %v1199 = vadd.f32 %v1043, %v1138
      %v1200 = vadd.f32 %v1044, %v1141
      %v1201 = vadd.f32 %v1045, %v1143
      %v1202 = vadd.f32 %v1046, %v1146
      %v1203 = vadd.f32 %v1047, %v1148
      %v1204 = vadd.f32 %v1048, %v1151
      %v1205 = vadd.f32 %v1049, %v1153
      %v1206 = vadd.f32 %v1050, %v1156
      %v1207 = vadd.f32 %v1051, %v1158
      %v1208 = vadd.f32 %v1052, %v1161
      %v1209 = vadd.f32 %v1053, %v1163
      %v1210 = vadd.f32 %v1054, %v1166
      %v1211 = vadd.f32 %v1055, %v1168
      %v1212 = vadd.f32 %v1056, %v1171
      %v1213 = vadd.f32 %v1057, %v1173
      %v1214 = vadd.f32 %v1058, %v1176
      %v1215 = vadd.f32 %v1059, %v1178
      %s1216 = scalar_lea.vmem %s223, 8
      %v1217 = vld [vmem:[%s1216] sm:$0x3]
      %vm1218 = vsmask.f32 6400
      %v1219 = vrot.slane %v396, 1
      %v1220 = vrot.slane %v392, 2
      %v1221 = vor.u32 %v1219, %v1220
      %v1222 = vrot.slane %v404, 1
      %v1223 = vrot.slane %v400, 2
      %v1224 = vor.u32 %v1222, %v1223
      %v1225 = vsel %vm1218, %v1221, %v1224
      %v1226 = vrot.slane %v412, 1
      %v1227 = vrot.slane %v408, 2
      %v1228 = vor.u32 %v1226, %v1227
      %v1229 = vsel %vm1218, %v1224, %v1228
      %v1230 = vrot.slane %v420, 1
      %v1231 = vrot.slane %v416, 2
      %v1232 = vor.u32 %v1230, %v1231
      %v1233 = vsel %vm1218, %v1228, %v1232
      %v1234 = vrot.slane %v428, 1
      %v1235 = vrot.slane %v424, 2
      %v1236 = vor.u32 %v1234, %v1235
      %v1237 = vsel %vm1218, %v1232, %v1236
      %v1238 = vrot.slane %v436, 1
      %v1239 = vrot.slane %v432, 2
      %v1240 = vor.u32 %v1238, %v1239
      %v1241 = vsel %vm1218, %v1236, %v1240
      %v1242 = vrot.slane %v444, 1
      %v1243 = vrot.slane %v440, 2
      %v1244 = vor.u32 %v1242, %v1243
      %v1245 = vsel %vm1218, %v1240, %v1244
      %v1246 = vrot.slane %v452, 1
      %v1247 = vrot.slane %v448, 2
      %v1248 = vor.u32 %v1246, %v1247
      %v1249 = vsel %vm1218, %v1244, %v1248
      %v1250 = vrot.slane %v460, 1
      %v1251 = vrot.slane %v456, 2
      %v1252 = vor.u32 %v1250, %v1251
      %v1253 = vsel %vm1218, %v1248, %v1252
      %v1254 = vrot.slane %v468, 1
      %v1255 = vrot.slane %v464, 2
      %v1256 = vor.u32 %v1254, %v1255
      %v1257 = vsel %vm1218, %v1252, %v1256
      %v1258 = vrot.slane %v476, 1
      %v1259 = vrot.slane %v472, 2
      %v1260 = vor.u32 %v1258, %v1259
      %v1261 = vsel %vm1218, %v1256, %v1260
      %v1262 = vrot.slane %v484, 1
      %v1263 = vrot.slane %v480, 2
      %v1264 = vor.u32 %v1262, %v1263
      %v1265 = vsel %vm1218, %v1260, %v1264
      %v1266 = vrot.slane %v492, 1
      %v1267 = vrot.slane %v488, 2
      %v1268 = vor.u32 %v1266, %v1267
      %v1269 = vsel %vm1218, %v1264, %v1268
      %v1270 = vrot.slane %v500, 1
      %v1271 = vrot.slane %v496, 2
      %v1272 = vor.u32 %v1270, %v1271
      %v1273 = vsel %vm1218, %v1268, %v1272
      %v1274 = vrot.slane %v508, 1
      %v1275 = vrot.slane %v504, 2
      %v1276 = vor.u32 %v1274, %v1275
      %v1277 = vsel %vm1218, %v1272, %v1276
      %v1278 = vrot.slane %v516, 1
      %v1279 = vrot.slane %v512, 2
      %v1280 = vor.u32 %v1278, %v1279
      %v1281 = vsel %vm1218, %v1276, %v1280
      %v1282 = vrot.slane %v524, 1
      %v1283 = vrot.slane %v520, 2
      %v1284 = vor.u32 %v1282, %v1283
      %v1285 = vsel %vm1218, %v1280, %v1284
      %v1287 = vshrl.u32 %v1066, 16
      %v1289 = vrot.slane %v1287, 1
      %v1290 = vshll.u32 %v1066, 16
      %v1292 = vrot.slane %v1290, 2
      %v1293 = vor.u32 %v1289, %v1292
      %v1294 = vsel %vm1218, %v1284, %v1293
      %v1296 = vshrl.u32 %v1067, 16
      %v1298 = vrot.slane %v1296, 1
      %v1299 = vshll.u32 %v1067, 16
      %v1301 = vrot.slane %v1299, 2
      %v1302 = vor.u32 %v1298, %v1301
      %v1303 = vsel %vm1218, %v1293, %v1302
      %v1305 = vsel %vm532, %v1225, 0
      %v1308 = vsel %vm532, %v1229, 0
      %v1311 = vsel %vm532, %v1233, 0
      %v1314 = vsel %vm532, %v1237, 0
      %v1317 = vsel %vm532, %v1241, 0
      %v1320 = vsel %vm532, %v1245, 0
      %v1323 = vsel %vm532, %v1249, 0
      %v1326 = vsel %vm532, %v1253, 0
      %v1329 = vsel %vm532, %v1257, 0
      %v1332 = vsel %vm532, %v1261, 0
      %v1335 = vsel %vm532, %v1265, 0
      %v1338 = vsel %vm532, %v1269, 0
      %v1341 = vsel %vm532, %v1273, 0
      %v1344 = vsel %vm532, %v1277, 0
      %v1347 = vsel %vm532, %v1281, 0
      %v1350 = vsel %vm532, %v1285, 0
      %v1353 = vsel %vm532, %v1294, 0
      %v1356 = vsel %vm532, %v1303, 0
      %v1359 = vsel %vm587, %v1217, 0
      %1361 = vmatpush.bf16.msra.mxu0 0
      %1362 = vmatpush.bf16.msra.mxu0 0
      %1363 = vmatpush.bf16.msra.mxu0 0
      %1364 = vmatpush.bf16.msra.mxu0 0
      %1365 = vmatpush.bf16.msra.mxu0 0
      %1366 = vmatpush.bf16.msra.mxu0 0
      %1367 = vmatpush.bf16.msra.mxu0 0
      %1368 = vmatpush.bf16.msra.mxu0 %v1359
      %1369 = vmatmul.bf16.gmra.mxu0 %v1305
      %v1370 = vpop.f32.mrf.mxu0
      %v1371 = vadd.f32 0.0, %v1370
      %v1372 = vpop.f32.mrf.mxu0
      %v1373 = vadd.f32 0.0, %v1372
      %1374 = vmatmul.bf16.gmra.mxu0 %v1308
      %v1375 = vpop.f32.mrf.mxu0
      %v1376 = vadd.f32 0.0, %v1375
      %v1377 = vpop.f32.mrf.mxu0
      %v1378 = vadd.f32 0.0, %v1377
      %1379 = vmatmul.bf16.gmra.mxu0 %v1311
      %v1380 = vpop.f32.mrf.mxu0
      %v1381 = vadd.f32 0.0, %v1380
      %v1382 = vpop.f32.mrf.mxu0
      %v1383 = vadd.f32 0.0, %v1382
      %1384 = vmatmul.bf16.gmra.mxu0 %v1314
      %v1385 = vpop.f32.mrf.mxu0
      %v1386 = vadd.f32 0.0, %v1385
      %v1387 = vpop.f32.mrf.mxu0
      %v1388 = vadd.f32 0.0, %v1387
      %1389 = vmatmul.bf16.gmra.mxu0 %v1317
      %v1390 = vpop.f32.mrf.mxu0
      %v1391 = vadd.f32 0.0, %v1390
      %v1392 = vpop.f32.mrf.mxu0
      %v1393 = vadd.f32 0.0, %v1392
      %1394 = vmatmul.bf16.gmra.mxu0 %v1320
      %v1395 = vpop.f32.mrf.mxu0
      %v1396 = vadd.f32 0.0, %v1395
      %v1397 = vpop.f32.mrf.mxu0
      %v1398 = vadd.f32 0.0, %v1397
      %1399 = vmatmul.bf16.gmra.mxu0 %v1323
      %v1400 = vpop.f32.mrf.mxu0
      %v1401 = vadd.f32 0.0, %v1400
      %v1402 = vpop.f32.mrf.mxu0
      %v1403 = vadd.f32 0.0, %v1402
      %1404 = vmatmul.bf16.gmra.mxu0 %v1326
      %v1405 = vpop.f32.mrf.mxu0
      %v1406 = vadd.f32 0.0, %v1405
      %v1407 = vpop.f32.mrf.mxu0
      %v1408 = vadd.f32 0.0, %v1407
      %1409 = vmatmul.bf16.gmra.mxu0 %v1329
      %v1410 = vpop.f32.mrf.mxu0
      %v1411 = vadd.f32 0.0, %v1410
      %v1412 = vpop.f32.mrf.mxu0
      %v1413 = vadd.f32 0.0, %v1412
      %1414 = vmatmul.bf16.gmra.mxu0 %v1332
      %v1415 = vpop.f32.mrf.mxu0
      %v1416 = vadd.f32 0.0, %v1415
      %v1417 = vpop.f32.mrf.mxu0
      %v1418 = vadd.f32 0.0, %v1417
      %1419 = vmatmul.bf16.gmra.mxu0 %v1335
      %v1420 = vpop.f32.mrf.mxu0
      %v1421 = vadd.f32 0.0, %v1420
      %v1422 = vpop.f32.mrf.mxu0
      %v1423 = vadd.f32 0.0, %v1422
      %1424 = vmatmul.bf16.gmra.mxu0 %v1338
      %v1425 = vpop.f32.mrf.mxu0
      %v1426 = vadd.f32 0.0, %v1425
      %v1427 = vpop.f32.mrf.mxu0
      %v1428 = vadd.f32 0.0, %v1427
      %1429 = vmatmul.bf16.gmra.mxu0 %v1341
      %v1430 = vpop.f32.mrf.mxu0
      %v1431 = vadd.f32 0.0, %v1430
      %v1432 = vpop.f32.mrf.mxu0
      %v1433 = vadd.f32 0.0, %v1432
      %1434 = vmatmul.bf16.gmra.mxu0 %v1344
      %v1435 = vpop.f32.mrf.mxu0
      %v1436 = vadd.f32 0.0, %v1435
      %v1437 = vpop.f32.mrf.mxu0
      %v1438 = vadd.f32 0.0, %v1437
      %1439 = vmatmul.bf16.gmra.mxu0 %v1347
      %v1440 = vpop.f32.mrf.mxu0
      %v1441 = vadd.f32 0.0, %v1440
      %v1442 = vpop.f32.mrf.mxu0
      %v1443 = vadd.f32 0.0, %v1442
      %1444 = vmatmul.bf16.gmra.mxu0 %v1350
      %v1445 = vpop.f32.mrf.mxu0
      %v1446 = vadd.f32 0.0, %v1445
      %v1447 = vpop.f32.mrf.mxu0
      %v1448 = vadd.f32 0.0, %v1447
      %1449 = vmatmul.bf16.gmra.mxu0 %v1353
      %v1450 = vpop.f32.mrf.mxu0
      %v1451 = vadd.f32 0.0, %v1450
      %v1452 = vpop.f32.mrf.mxu0
      %v1453 = vadd.f32 0.0, %v1452
      %1454 = vmatmul.bf16.gmra.mxu0 %v1356
      %v1455 = vpop.f32.mrf.mxu0
      %v1456 = vadd.f32 0.0, %v1455
      %v1457 = vpop.f32.mrf.mxu0
      %v1458 = vadd.f32 0.0, %v1457
      %1459 = vdwg.mxu0
      %v1460 = vadd.f32 %v1180, %v1371
      %v1461 = vadd.f32 %v1181, %v1373
      %v1462 = vadd.f32 %v1182, %v1376
      %v1463 = vadd.f32 %v1183, %v1378
      %v1464 = vadd.f32 %v1184, %v1381
      %v1465 = vadd.f32 %v1185, %v1383
      %v1466 = vadd.f32 %v1186, %v1386
      %v1467 = vadd.f32 %v1187, %v1388
      %v1468 = vadd.f32 %v1188, %v1391
      %v1469 = vadd.f32 %v1189, %v1393
      %v1470 = vadd.f32 %v1190, %v1396
      %v1471 = vadd.f32 %v1191, %v1398
      %v1472 = vadd.f32 %v1192, %v1401
      %v1473 = vadd.f32 %v1193, %v1403
      %v1474 = vadd.f32 %v1194, %v1406
      %v1475 = vadd.f32 %v1195, %v1408
      %v1476 = vadd.f32 %v1196, %v1411
      %v1477 = vadd.f32 %v1197, %v1413
      %v1478 = vadd.f32 %v1198, %v1416
      %v1479 = vadd.f32 %v1199, %v1418
      %v1480 = vadd.f32 %v1200, %v1421
      %v1481 = vadd.f32 %v1201, %v1423
      %v1482 = vadd.f32 %v1202, %v1426
      %v1483 = vadd.f32 %v1203, %v1428
      %v1484 = vadd.f32 %v1204, %v1431
      %v1485 = vadd.f32 %v1205, %v1433
      %v1486 = vadd.f32 %v1206, %v1436
      %v1487 = vadd.f32 %v1207, %v1438
      %v1488 = vadd.f32 %v1208, %v1441
      %v1489 = vadd.f32 %v1209, %v1443
      %v1490 = vadd.f32 %v1210, %v1446
      %v1491 = vadd.f32 %v1211, %v1448
      %v1492 = vadd.f32 %v1212, %v1451
      %v1493 = vadd.f32 %v1213, %v1453
      %v1494 = vadd.f32 %v1214, %v1456
      %v1495 = vadd.f32 %v1215, %v1458
      %s1496 = scalar_lea.vmem %s223, 10
      %v1497 = vld [vmem:[%s1496] sm:$0x3]
      %vm1498 = vcmask 1045504
      %v1499 = vrot.slane %v365, 2
      %v1500 = vrot.slane %v366, 2
      %v1501 = vsel %vm1498, %v1499, %v1500
      %v1502 = vrot.slane %v367, 2
      %v1503 = vsel %vm1498, %v1500, %v1502
      %v1504 = vrot.slane %v368, 2
      %v1505 = vsel %vm1498, %v1502, %v1504
      %v1506 = vrot.slane %v369, 2
      %v1507 = vsel %vm1498, %v1504, %v1506
      %v1508 = vrot.slane %v370, 2
      %v1509 = vsel %vm1498, %v1506, %v1508
      %v1510 = vrot.slane %v371, 2
      %v1511 = vsel %vm1498, %v1508, %v1510
      %v1512 = vrot.slane %v372, 2
      %v1513 = vsel %vm1498, %v1510, %v1512
      %v1514 = vrot.slane %v373, 2
      %v1515 = vsel %vm1498, %v1512, %v1514
      %v1516 = vrot.slane %v374, 2
      %v1517 = vsel %vm1498, %v1514, %v1516
      %v1518 = vrot.slane %v375, 2
      %v1519 = vsel %vm1498, %v1516, %v1518
      %v1520 = vrot.slane %v376, 2
      %v1521 = vsel %vm1498, %v1518, %v1520
      %v1522 = vrot.slane %v377, 2
      %v1523 = vsel %vm1498, %v1520, %v1522
      %v1524 = vrot.slane %v378, 2
      %v1525 = vsel %vm1498, %v1522, %v1524
      %v1526 = vrot.slane %v379, 2
      %v1527 = vsel %vm1498, %v1524, %v1526
      %v1528 = vrot.slane %v380, 2
      %v1529 = vsel %vm1498, %v1526, %v1528
      %v1530 = vrot.slane %v381, 2
      %v1531 = vsel %vm1498, %v1528, %v1530
      %v1532 = vrot.slane %v1066, 2
      %v1533 = vsel %vm1498, %v1530, %v1532
      %v1534 = vrot.slane %v1067, 2
      %v1535 = vsel %vm1498, %v1532, %v1534
      %v1537 = vsel %vm532, %v1501, 0
      %v1540 = vsel %vm532, %v1503, 0
      %v1543 = vsel %vm532, %v1505, 0
      %v1546 = vsel %vm532, %v1507, 0
      %v1549 = vsel %vm532, %v1509, 0
      %v1552 = vsel %vm532, %v1511, 0
      %v1555 = vsel %vm532, %v1513, 0
      %v1558 = vsel %vm532, %v1515, 0
      %v1561 = vsel %vm532, %v1517, 0
      %v1564 = vsel %vm532, %v1519, 0
      %v1567 = vsel %vm532, %v1521, 0
      %v1570 = vsel %vm532, %v1523, 0
      %v1573 = vsel %vm532, %v1525, 0
      %v1576 = vsel %vm532, %v1527, 0
      %v1579 = vsel %vm532, %v1529, 0
      %v1582 = vsel %vm532, %v1531, 0
      %v1585 = vsel %vm532, %v1533, 0
      %v1588 = vsel %vm532, %v1535, 0
      %v1591 = vsel %vm587, %v1497, 0
      %1593 = vmatpush.bf16.msra.mxu0 0
      %1594 = vmatpush.bf16.msra.mxu0 0
      %1595 = vmatpush.bf16.msra.mxu0 0
      %1596 = vmatpush.bf16.msra.mxu0 0
      %1597 = vmatpush.bf16.msra.mxu0 0
      %1598 = vmatpush.bf16.msra.mxu0 0
      %1599 = vmatpush.bf16.msra.mxu0 0
      %1600 = vmatpush.bf16.msra.mxu0 %v1591
      %1601 = vmatmul.bf16.gmra.mxu0 %v1537
      %v1602 = vpop.f32.mrf.mxu0
      %v1603 = vadd.f32 0.0, %v1602
      %v1604 = vpop.f32.mrf.mxu0
      %v1605 = vadd.f32 0.0, %v1604
      %1606 = vmatmul.bf16.gmra.mxu0 %v1540
      %v1607 = vpop.f32.mrf.mxu0
      %v1608 = vadd.f32 0.0, %v1607
      %v1609 = vpop.f32.mrf.mxu0
      %v1610 = vadd.f32 0.0, %v1609
      %1611 = vmatmul.bf16.gmra.mxu0 %v1543
      %v1612 = vpop.f32.mrf.mxu0
      %v1613 = vadd.f32 0.0, %v1612
      %v1614 = vpop.f32.mrf.mxu0
      %v1615 = vadd.f32 0.0, %v1614
      %1616 = vmatmul.bf16.gmra.mxu0 %v1546
      %v1617 = vpop.f32.mrf.mxu0
      %v1618 = vadd.f32 0.0, %v1617
      %v1619 = vpop.f32.mrf.mxu0
      %v1620 = vadd.f32 0.0, %v1619
      %1621 = vmatmul.bf16.gmra.mxu0 %v1549
      %v1622 = vpop.f32.mrf.mxu0
      %v1623 = vadd.f32 0.0, %v1622
      %v1624 = vpop.f32.mrf.mxu0
      %v1625 = vadd.f32 0.0, %v1624
      %1626 = vmatmul.bf16.gmra.mxu0 %v1552
      %v1627 = vpop.f32.mrf.mxu0
      %v1628 = vadd.f32 0.0, %v1627
      %v1629 = vpop.f32.mrf.mxu0
      %v1630 = vadd.f32 0.0, %v1629
      %1631 = vmatmul.bf16.gmra.mxu0 %v1555
      %v1632 = vpop.f32.mrf.mxu0
      %v1633 = vadd.f32 0.0, %v1632
      %v1634 = vpop.f32.mrf.mxu0
      %v1635 = vadd.f32 0.0, %v1634
      %1636 = vmatmul.bf16.gmra.mxu0 %v1558
      %v1637 = vpop.f32.mrf.mxu0
      %v1638 = vadd.f32 0.0, %v1637
      %v1639 = vpop.f32.mrf.mxu0
      %v1640 = vadd.f32 0.0, %v1639
      %1641 = vmatmul.bf16.gmra.mxu0 %v1561
      %v1642 = vpop.f32.mrf.mxu0
      %v1643 = vadd.f32 0.0, %v1642
      %v1644 = vpop.f32.mrf.mxu0
      %v1645 = vadd.f32 0.0, %v1644
      %1646 = vmatmul.bf16.gmra.mxu0 %v1564
      %v1647 = vpop.f32.mrf.mxu0
      %v1648 = vadd.f32 0.0, %v1647
      %v1649 = vpop.f32.mrf.mxu0
      %v1650 = vadd.f32 0.0, %v1649
      %1651 = vmatmul.bf16.gmra.mxu0 %v1567
      %v1652 = vpop.f32.mrf.mxu0
      %v1653 = vadd.f32 0.0, %v1652
      %v1654 = vpop.f32.mrf.mxu0
      %v1655 = vadd.f32 0.0, %v1654
      %1656 = vmatmul.bf16.gmra.mxu0 %v1570
      %v1657 = vpop.f32.mrf.mxu0
      %v1658 = vadd.f32 0.0, %v1657
      %v1659 = vpop.f32.mrf.mxu0
      %v1660 = vadd.f32 0.0, %v1659
      %1661 = vmatmul.bf16.gmra.mxu0 %v1573
      %v1662 = vpop.f32.mrf.mxu0
      %v1663 = vadd.f32 0.0, %v1662
      %v1664 = vpop.f32.mrf.mxu0
      %v1665 = vadd.f32 0.0, %v1664
      %1666 = vmatmul.bf16.gmra.mxu0 %v1576
      %v1667 = vpop.f32.mrf.mxu0
      %v1668 = vadd.f32 0.0, %v1667
      %v1669 = vpop.f32.mrf.mxu0
      %v1670 = vadd.f32 0.0, %v1669
      %1671 = vmatmul.bf16.gmra.mxu0 %v1579
      %v1672 = vpop.f32.mrf.mxu0
      %v1673 = vadd.f32 0.0, %v1672
      %v1674 = vpop.f32.mrf.mxu0
      %v1675 = vadd.f32 0.0, %v1674
      %1676 = vmatmul.bf16.gmra.mxu0 %v1582
      %v1677 = vpop.f32.mrf.mxu0
      %v1678 = vadd.f32 0.0, %v1677
      %v1679 = vpop.f32.mrf.mxu0
      %v1680 = vadd.f32 0.0, %v1679
      %1681 = vmatmul.bf16.gmra.mxu0 %v1585
      %v1682 = vpop.f32.mrf.mxu0
      %v1683 = vadd.f32 0.0, %v1682
      %v1684 = vpop.f32.mrf.mxu0
      %v1685 = vadd.f32 0.0, %v1684
      %1686 = vmatmul.bf16.gmra.mxu0 %v1588
      %v1687 = vpop.f32.mrf.mxu0
      %v1688 = vadd.f32 0.0, %v1687
      %v1689 = vpop.f32.mrf.mxu0
      %v1690 = vadd.f32 0.0, %v1689
      %1691 = vdwg.mxu0
      %v1692 = vadd.f32 %v1460, %v1603
      %v1693 = vadd.f32 %v1461, %v1605
      %v1694 = vadd.f32 %v1462, %v1608
      %v1695 = vadd.f32 %v1463, %v1610
      %v1696 = vadd.f32 %v1464, %v1613
      %v1697 = vadd.f32 %v1465, %v1615
      %v1698 = vadd.f32 %v1466, %v1618
      %v1699 = vadd.f32 %v1467, %v1620
      %v1700 = vadd.f32 %v1468, %v1623
      %v1701 = vadd.f32 %v1469, %v1625
      %v1702 = vadd.f32 %v1470, %v1628
      %v1703 = vadd.f32 %v1471, %v1630
      %v1704 = vadd.f32 %v1472, %v1633
      %v1705 = vadd.f32 %v1473, %v1635
      %v1706 = vadd.f32 %v1474, %v1638
      %v1707 = vadd.f32 %v1475, %v1640
      %v1708 = vadd.f32 %v1476, %v1643
      %v1709 = vadd.f32 %v1477, %v1645
      %v1710 = vadd.f32 %v1478, %v1648
      %v1711 = vadd.f32 %v1479, %v1650
      %v1712 = vadd.f32 %v1480, %v1653
      %v1713 = vadd.f32 %v1481, %v1655
      %v1714 = vadd.f32 %v1482, %v1658
      %v1715 = vadd.f32 %v1483, %v1660
      %v1716 = vadd.f32 %v1484, %v1663
      %v1717 = vadd.f32 %v1485, %v1665
      %v1718 = vadd.f32 %v1486, %v1668
      %v1719 = vadd.f32 %v1487, %v1670
      %v1720 = vadd.f32 %v1488, %v1673
      %v1721 = vadd.f32 %v1489, %v1675
      %v1722 = vadd.f32 %v1490, %v1678
      %v1723 = vadd.f32 %v1491, %v1680
      %v1724 = vadd.f32 %v1492, %v1683
      %v1725 = vadd.f32 %v1493, %v1685
      %v1726 = vadd.f32 %v1494, %v1688
      %v1727 = vadd.f32 %v1495, %v1690
      %s1728 = scalar_lea.vmem %s223, 12
      %v1729 = vld [vmem:[%s1728] sm:$0x3]
      %v1732 = vunpack.c.l.b16 %v285
      %v1733 = vunpack.c.l.b16 %v286
      %v1734 = vpack.c.b16 %v1732, %v1065
      %v1735 = vpack.c.b16 %v1733, %v1733
      %v1736 = vrot.slane %v1734, 2
      %v1737 = vsel %vm1498, %v1532, %v1736
      %v1738 = vrot.slane %v1735, 2
      %v1739 = vsel %vm1498, %v1736, %v1738
      %v1741 = vsel %vm532, %v1737, 0
      %v1744 = vsel %vm532, %v1739, 0
      %v1747 = vsel %vm587, %v1729, 0
      %1749 = vmatpush.bf16.msra.mxu0 0
      %1750 = vmatpush.bf16.msra.mxu0 0
      %1751 = vmatpush.bf16.msra.mxu0 0
      %1752 = vmatpush.bf16.msra.mxu0 0
      %1753 = vmatpush.bf16.msra.mxu0 0
      %1754 = vmatpush.bf16.msra.mxu0 0
      %1755 = vmatpush.bf16.msra.mxu0 0
      %1756 = vmatpush.bf16.msra.mxu0 %v1747
      %1757 = vmatmul.bf16.gmra.mxu0 %v1540
      %v1758 = vpop.f32.mrf.mxu0
      %v1759 = vadd.f32 0.0, %v1758
      %v1760 = vpop.f32.mrf.mxu0
      %v1761 = vadd.f32 0.0, %v1760
      %1762 = vmatmul.bf16.gmra.mxu0 %v1543
      %v1763 = vpop.f32.mrf.mxu0
      %v1764 = vadd.f32 0.0, %v1763
      %v1765 = vpop.f32.mrf.mxu0
      %v1766 = vadd.f32 0.0, %v1765
      %1767 = vmatmul.bf16.gmra.mxu0 %v1546
      %v1768 = vpop.f32.mrf.mxu0
      %v1769 = vadd.f32 0.0, %v1768
      %v1770 = vpop.f32.mrf.mxu0
      %v1771 = vadd.f32 0.0, %v1770
      %1772 = vmatmul.bf16.gmra.mxu0 %v1549
      %v1773 = vpop.f32.mrf.mxu0
      %v1774 = vadd.f32 0.0, %v1773
      %v1775 = vpop.f32.mrf.mxu0
      %v1776 = vadd.f32 0.0, %v1775
      %1777 = vmatmul.bf16.gmra.mxu0 %v1552
      %v1778 = vpop.f32.mrf.mxu0
      %v1779 = vadd.f32 0.0, %v1778
      %v1780 = vpop.f32.mrf.mxu0
      %v1781 = vadd.f32 0.0, %v1780
      %1782 = vmatmul.bf16.gmra.mxu0 %v1555
      %v1783 = vpop.f32.mrf.mxu0
      %v1784 = vadd.f32 0.0, %v1783
      %v1785 = vpop.f32.mrf.mxu0
      %v1786 = vadd.f32 0.0, %v1785
      %1787 = vmatmul.bf16.gmra.mxu0 %v1558
      %v1788 = vpop.f32.mrf.mxu0
      %v1789 = vadd.f32 0.0, %v1788
      %v1790 = vpop.f32.mrf.mxu0
      %v1791 = vadd.f32 0.0, %v1790
      %1792 = vmatmul.bf16.gmra.mxu0 %v1561
      %v1793 = vpop.f32.mrf.mxu0
      %v1794 = vadd.f32 0.0, %v1793
      %v1795 = vpop.f32.mrf.mxu0
      %v1796 = vadd.f32 0.0, %v1795
      %1797 = vmatmul.bf16.gmra.mxu0 %v1564
      %v1798 = vpop.f32.mrf.mxu0
      %v1799 = vadd.f32 0.0, %v1798
      %v1800 = vpop.f32.mrf.mxu0
      %v1801 = vadd.f32 0.0, %v1800
      %1802 = vmatmul.bf16.gmra.mxu0 %v1567
      %v1803 = vpop.f32.mrf.mxu0
      %v1804 = vadd.f32 0.0, %v1803
      %v1805 = vpop.f32.mrf.mxu0
      %v1806 = vadd.f32 0.0, %v1805
      %1807 = vmatmul.bf16.gmra.mxu0 %v1570
      %v1808 = vpop.f32.mrf.mxu0
      %v1809 = vadd.f32 0.0, %v1808
      %v1810 = vpop.f32.mrf.mxu0
      %v1811 = vadd.f32 0.0, %v1810
      %1812 = vmatmul.bf16.gmra.mxu0 %v1573
      %v1813 = vpop.f32.mrf.mxu0
      %v1814 = vadd.f32 0.0, %v1813
      %v1815 = vpop.f32.mrf.mxu0
      %v1816 = vadd.f32 0.0, %v1815
      %1817 = vmatmul.bf16.gmra.mxu0 %v1576
      %v1818 = vpop.f32.mrf.mxu0
      %v1819 = vadd.f32 0.0, %v1818
      %v1820 = vpop.f32.mrf.mxu0
      %v1821 = vadd.f32 0.0, %v1820
      %1822 = vmatmul.bf16.gmra.mxu0 %v1579
      %v1823 = vpop.f32.mrf.mxu0
      %v1824 = vadd.f32 0.0, %v1823
      %v1825 = vpop.f32.mrf.mxu0
      %v1826 = vadd.f32 0.0, %v1825
      %1827 = vmatmul.bf16.gmra.mxu0 %v1582
      %v1828 = vpop.f32.mrf.mxu0
      %v1829 = vadd.f32 0.0, %v1828
      %v1830 = vpop.f32.mrf.mxu0
      %v1831 = vadd.f32 0.0, %v1830
      %1832 = vmatmul.bf16.gmra.mxu0 %v1585
      %v1833 = vpop.f32.mrf.mxu0
      %v1834 = vadd.f32 0.0, %v1833
      %v1835 = vpop.f32.mrf.mxu0
      %v1836 = vadd.f32 0.0, %v1835
      %1837 = vmatmul.bf16.gmra.mxu0 %v1741
      %v1838 = vpop.f32.mrf.mxu0
      %v1839 = vadd.f32 0.0, %v1838
      %v1840 = vpop.f32.mrf.mxu0
      %v1841 = vadd.f32 0.0, %v1840
      %1842 = vmatmul.bf16.gmra.mxu0 %v1744
      %v1843 = vpop.f32.mrf.mxu0
      %v1844 = vadd.f32 0.0, %v1843
      %v1845 = vpop.f32.mrf.mxu0
      %v1846 = vadd.f32 0.0, %v1845
      %1847 = vdwg.mxu0
      %v1848 = vadd.f32 %v1692, %v1759
      %v1849 = vadd.f32 %v1693, %v1761
      %v1850 = vadd.f32 %v1694, %v1764
      %v1851 = vadd.f32 %v1695, %v1766
      %v1852 = vadd.f32 %v1696, %v1769
      %v1853 = vadd.f32 %v1697, %v1771
      %v1854 = vadd.f32 %v1698, %v1774
      %v1855 = vadd.f32 %v1699, %v1776
      %v1856 = vadd.f32 %v1700, %v1779
      %v1857 = vadd.f32 %v1701, %v1781
      %v1858 = vadd.f32 %v1702, %v1784
      %v1859 = vadd.f32 %v1703, %v1786
      %v1860 = vadd.f32 %v1704, %v1789
      %v1861 = vadd.f32 %v1705, %v1791
      %v1862 = vadd.f32 %v1706, %v1794
      %v1863 = vadd.f32 %v1707, %v1796
      %v1864 = vadd.f32 %v1708, %v1799
      %v1865 = vadd.f32 %v1709, %v1801
      %v1866 = vadd.f32 %v1710, %v1804
      %v1867 = vadd.f32 %v1711, %v1806
      %v1868 = vadd.f32 %v1712, %v1809
      %v1869 = vadd.f32 %v1713, %v1811
      %v1870 = vadd.f32 %v1714, %v1814
      %v1871 = vadd.f32 %v1715, %v1816
      %v1872 = vadd.f32 %v1716, %v1819
      %v1873 = vadd.f32 %v1717, %v1821
      %v1874 = vadd.f32 %v1718, %v1824
      %v1875 = vadd.f32 %v1719, %v1826
      %v1876 = vadd.f32 %v1720, %v1829
      %v1877 = vadd.f32 %v1721, %v1831
      %v1878 = vadd.f32 %v1722, %v1834
      %v1879 = vadd.f32 %v1723, %v1836
      %v1880 = vadd.f32 %v1724, %v1839
      %v1881 = vadd.f32 %v1725, %v1841
      %v1882 = vadd.f32 %v1726, %v1844
      %v1883 = vadd.f32 %v1727, %v1846
      %s1884 = scalar_lea.vmem %s223, 14
      %v1885 = vld [vmem:[%s1884] sm:$0x3]
      %vm1886 = vsmask.f32 5376
      %v1887 = vrot.slane %v404, 2
      %v1888 = vrot.slane %v400, 3
      %v1889 = vor.u32 %v1887, %v1888
      %v1890 = vrot.slane %v412, 2
      %v1891 = vrot.slane %v408, 3
      %v1892 = vor.u32 %v1890, %v1891
      %v1893 = vsel %vm1886, %v1889, %v1892
      %v1894 = vrot.slane %v420, 2
      %v1895 = vrot.slane %v416, 3
      %v1896 = vor.u32 %v1894, %v1895
      %v1897 = vsel %vm1886, %v1892, %v1896
      %v1898 = vrot.slane %v428, 2
      %v1899 = vrot.slane %v424, 3
      %v1900 = vor.u32 %v1898, %v1899
      %v1901 = vsel %vm1886, %v1896, %v1900
      %v1902 = vrot.slane %v436, 2
      %v1903 = vrot.slane %v432, 3
      %v1904 = vor.u32 %v1902, %v1903
      %v1905 = vsel %vm1886, %v1900, %v1904
      %v1906 = vrot.slane %v444, 2
      %v1907 = vrot.slane %v440, 3
      %v1908 = vor.u32 %v1906, %v1907
      %v1909 = vsel %vm1886, %v1904, %v1908
      %v1910 = vrot.slane %v452, 2
      %v1911 = vrot.slane %v448, 3
      %v1912 = vor.u32 %v1910, %v1911
      %v1913 = vsel %vm1886, %v1908, %v1912
      %v1914 = vrot.slane %v460, 2
      %v1915 = vrot.slane %v456, 3
      %v1916 = vor.u32 %v1914, %v1915
      %v1917 = vsel %vm1886, %v1912, %v1916
      %v1918 = vrot.slane %v468, 2
      %v1919 = vrot.slane %v464, 3
      %v1920 = vor.u32 %v1918, %v1919
      %v1921 = vsel %vm1886, %v1916, %v1920
      %v1922 = vrot.slane %v476, 2
      %v1923 = vrot.slane %v472, 3
      %v1924 = vor.u32 %v1922, %v1923
      %v1925 = vsel %vm1886, %v1920, %v1924
      %v1926 = vrot.slane %v484, 2
      %v1927 = vrot.slane %v480, 3
      %v1928 = vor.u32 %v1926, %v1927
      %v1929 = vsel %vm1886, %v1924, %v1928
      %v1930 = vrot.slane %v492, 2
      %v1931 = vrot.slane %v488, 3
      %v1932 = vor.u32 %v1930, %v1931
      %v1933 = vsel %vm1886, %v1928, %v1932
      %v1934 = vrot.slane %v500, 2
      %v1935 = vrot.slane %v496, 3
      %v1936 = vor.u32 %v1934, %v1935
      %v1937 = vsel %vm1886, %v1932, %v1936
      %v1938 = vrot.slane %v508, 2
      %v1939 = vrot.slane %v504, 3
      %v1940 = vor.u32 %v1938, %v1939
      %v1941 = vsel %vm1886, %v1936, %v1940
      %v1942 = vrot.slane %v516, 2
      %v1943 = vrot.slane %v512, 3
      %v1944 = vor.u32 %v1942, %v1943
      %v1945 = vsel %vm1886, %v1940, %v1944
      %v1946 = vrot.slane %v524, 2
      %v1947 = vrot.slane %v520, 3
      %v1948 = vor.u32 %v1946, %v1947
      %v1949 = vsel %vm1886, %v1944, %v1948
      %v1950 = vrot.slane %v1287, 2
      %v1951 = vrot.slane %v1290, 3
      %v1952 = vor.u32 %v1950, %v1951
      %v1953 = vsel %vm1886, %v1948, %v1952
      %v1955 = vshrl.u32 %v1734, 16
      %v1957 = vrot.slane %v1955, 2
      %v1958 = vshll.u32 %v1734, 16
      %v1960 = vrot.slane %v1958, 3
      %v1961 = vor.u32 %v1957, %v1960
      %v1962 = vsel %vm1886, %v1952, %v1961
      %v1964 = vshrl.u32 %v1735, 16
      %v1966 = vrot.slane %v1964, 2
      %v1967 = vshll.u32 %v1735, 16
      %v1969 = vrot.slane %v1967, 3
      %v1970 = vor.u32 %v1966, %v1969
      %v1971 = vsel %vm1886, %v1961, %v1970
      %v1973 = vsel %vm532, %v1893, 0
      %v1976 = vsel %vm532, %v1897, 0
      %v1979 = vsel %vm532, %v1901, 0
      %v1982 = vsel %vm532, %v1905, 0
      %v1985 = vsel %vm532, %v1909, 0
      %v1988 = vsel %vm532, %v1913, 0
      %v1991 = vsel %vm532, %v1917, 0
      %v1994 = vsel %vm532, %v1921, 0
      %v1997 = vsel %vm532, %v1925, 0
      %v2000 = vsel %vm532, %v1929, 0
      %v2003 = vsel %vm532, %v1933, 0
      %v2006 = vsel %vm532, %v1937, 0
      %v2009 = vsel %vm532, %v1941, 0
      %v2012 = vsel %vm532, %v1945, 0
      %v2015 = vsel %vm532, %v1949, 0
      %v2018 = vsel %vm532, %v1953, 0
      %v2021 = vsel %vm532, %v1962, 0
      %v2024 = vsel %vm532, %v1971, 0
      %v2027 = vsel %vm587, %v1885, 0
      %2029 = vmatpush.bf16.msra.mxu0 0
      %2030 = vmatpush.bf16.msra.mxu0 0
      %2031 = vmatpush.bf16.msra.mxu0 0
      %2032 = vmatpush.bf16.msra.mxu0 0
      %2033 = vmatpush.bf16.msra.mxu0 0
      %2034 = vmatpush.bf16.msra.mxu0 0
      %2035 = vmatpush.bf16.msra.mxu0 0
      %2036 = vmatpush.bf16.msra.mxu0 %v2027
      %2037 = vmatmul.bf16.gmra.mxu0 %v1973
      %v2038 = vpop.f32.mrf.mxu0
      %v2039 = vadd.f32 0.0, %v2038
      %v2040 = vpop.f32.mrf.mxu0
      %v2041 = vadd.f32 0.0, %v2040
      %2042 = vmatmul.bf16.gmra.mxu0 %v1976
      %v2043 = vpop.f32.mrf.mxu0
      %v2044 = vadd.f32 0.0, %v2043
      %v2045 = vpop.f32.mrf.mxu0
      %v2046 = vadd.f32 0.0, %v2045
      %2047 = vmatmul.bf16.gmra.mxu0 %v1979
      %v2048 = vpop.f32.mrf.mxu0
      %v2049 = vadd.f32 0.0, %v2048
      %v2050 = vpop.f32.mrf.mxu0
      %v2051 = vadd.f32 0.0, %v2050
      %2052 = vmatmul.bf16.gmra.mxu0 %v1982
      %v2053 = vpop.f32.mrf.mxu0
      %v2054 = vadd.f32 0.0, %v2053
      %v2055 = vpop.f32.mrf.mxu0
      %v2056 = vadd.f32 0.0, %v2055
      %2057 = vmatmul.bf16.gmra.mxu0 %v1985
      %v2058 = vpop.f32.mrf.mxu0
      %v2059 = vadd.f32 0.0, %v2058
      %v2060 = vpop.f32.mrf.mxu0
      %v2061 = vadd.f32 0.0, %v2060
      %2062 = vmatmul.bf16.gmra.mxu0 %v1988
      %v2063 = vpop.f32.mrf.mxu0
      %v2064 = vadd.f32 0.0, %v2063
      %v2065 = vpop.f32.mrf.mxu0
      %v2066 = vadd.f32 0.0, %v2065
      %2067 = vmatmul.bf16.gmra.mxu0 %v1991
      %v2068 = vpop.f32.mrf.mxu0
      %v2069 = vadd.f32 0.0, %v2068
      %v2070 = vpop.f32.mrf.mxu0
      %v2071 = vadd.f32 0.0, %v2070
      %2072 = vmatmul.bf16.gmra.mxu0 %v1994
      %v2073 = vpop.f32.mrf.mxu0
      %v2074 = vadd.f32 0.0, %v2073
      %v2075 = vpop.f32.mrf.mxu0
      %v2076 = vadd.f32 0.0, %v2075
      %2077 = vmatmul.bf16.gmra.mxu0 %v1997
      %v2078 = vpop.f32.mrf.mxu0
      %v2079 = vadd.f32 0.0, %v2078
      %v2080 = vpop.f32.mrf.mxu0
      %v2081 = vadd.f32 0.0, %v2080
      %2082 = vmatmul.bf16.gmra.mxu0 %v2000
      %v2083 = vpop.f32.mrf.mxu0
      %v2084 = vadd.f32 0.0, %v2083
      %v2085 = vpop.f32.mrf.mxu0
      %v2086 = vadd.f32 0.0, %v2085
      %2087 = vmatmul.bf16.gmra.mxu0 %v2003
      %v2088 = vpop.f32.mrf.mxu0
      %v2089 = vadd.f32 0.0, %v2088
      %v2090 = vpop.f32.mrf.mxu0
      %v2091 = vadd.f32 0.0, %v2090
      %2092 = vmatmul.bf16.gmra.mxu0 %v2006
      %v2093 = vpop.f32.mrf.mxu0
      %v2094 = vadd.f32 0.0, %v2093
      %v2095 = vpop.f32.mrf.mxu0
      %v2096 = vadd.f32 0.0, %v2095
      %2097 = vmatmul.bf16.gmra.mxu0 %v2009
      %v2098 = vpop.f32.mrf.mxu0
      %v2099 = vadd.f32 0.0, %v2098
      %v2100 = vpop.f32.mrf.mxu0
      %v2101 = vadd.f32 0.0, %v2100
      %2102 = vmatmul.bf16.gmra.mxu0 %v2012
      %v2103 = vpop.f32.mrf.mxu0
      %v2104 = vadd.f32 0.0, %v2103
      %v2105 = vpop.f32.mrf.mxu0
      %v2106 = vadd.f32 0.0, %v2105
      %2107 = vmatmul.bf16.gmra.mxu0 %v2015
      %v2108 = vpop.f32.mrf.mxu0
      %v2109 = vadd.f32 0.0, %v2108
      %v2110 = vpop.f32.mrf.mxu0
      %v2111 = vadd.f32 0.0, %v2110
      %2112 = vmatmul.bf16.gmra.mxu0 %v2018
      %v2113 = vpop.f32.mrf.mxu0
      %v2114 = vadd.f32 0.0, %v2113
      %v2115 = vpop.f32.mrf.mxu0
      %v2116 = vadd.f32 0.0, %v2115
      %2117 = vmatmul.bf16.gmra.mxu0 %v2021
      %v2118 = vpop.f32.mrf.mxu0
      %v2119 = vadd.f32 0.0, %v2118
      %v2120 = vpop.f32.mrf.mxu0
      %v2121 = vadd.f32 0.0, %v2120
      %2122 = vmatmul.bf16.gmra.mxu0 %v2024
      %v2123 = vpop.f32.mrf.mxu0
      %v2124 = vadd.f32 0.0, %v2123
      %v2125 = vpop.f32.mrf.mxu0
      %v2126 = vadd.f32 0.0, %v2125
      %2127 = vdwg.mxu0
      %v2128 = vadd.f32 %v1848, %v2039
      %v2129 = vadd.f32 %v1849, %v2041
      %v2130 = vadd.f32 %v1850, %v2044
      %v2131 = vadd.f32 %v1851, %v2046
      %v2132 = vadd.f32 %v1852, %v2049
      %v2133 = vadd.f32 %v1853, %v2051
      %v2134 = vadd.f32 %v1854, %v2054
      %v2135 = vadd.f32 %v1855, %v2056
      %v2136 = vadd.f32 %v1856, %v2059
      %v2137 = vadd.f32 %v1857, %v2061
      %v2138 = vadd.f32 %v1858, %v2064
      %v2139 = vadd.f32 %v1859, %v2066
      %v2140 = vadd.f32 %v1860, %v2069
      %v2141 = vadd.f32 %v1861, %v2071
      %v2142 = vadd.f32 %v1862, %v2074
      %v2143 = vadd.f32 %v1863, %v2076
      %v2144 = vadd.f32 %v1864, %v2079
      %v2145 = vadd.f32 %v1865, %v2081
      %v2146 = vadd.f32 %v1866, %v2084
      %v2147 = vadd.f32 %v1867, %v2086
      %v2148 = vadd.f32 %v1868, %v2089
      %v2149 = vadd.f32 %v1869, %v2091
      %v2150 = vadd.f32 %v1870, %v2094
      %v2151 = vadd.f32 %v1871, %v2096
      %v2152 = vadd.f32 %v1872, %v2099
      %v2153 = vadd.f32 %v1873, %v2101
      %v2154 = vadd.f32 %v1874, %v2104
      %v2155 = vadd.f32 %v1875, %v2106
      %v2156 = vadd.f32 %v1876, %v2109
      %v2157 = vadd.f32 %v1877, %v2111
      %v2158 = vadd.f32 %v1878, %v2114
      %v2159 = vadd.f32 %v1879, %v2116
      %v2160 = vadd.f32 %v1880, %v2119
      %v2161 = vadd.f32 %v1881, %v2121
      %v2162 = vadd.f32 %v1882, %v2124
      %v2163 = vadd.f32 %v1883, %v2126
      %s2164 = scalar_lea.vmem %s223, 16
      %v2165 = vld [vmem:[%s2164] sm:$0x3]
      %vm2166 = vcmask 1044480
      %v2167 = vrot.slane %v366, 3
      %v2168 = vrot.slane %v367, 3
      %v2169 = vsel %vm2166, %v2167, %v2168
      %v2170 = vrot.slane %v368, 3
      %v2171 = vsel %vm2166, %v2168, %v2170
      %v2172 = vrot.slane %v369, 3
      %v2173 = vsel %vm2166, %v2170, %v2172
      %v2174 = vrot.slane %v370, 3
      %v2175 = vsel %vm2166, %v2172, %v2174
      %v2176 = vrot.slane %v371, 3
      %v2177 = vsel %vm2166, %v2174, %v2176
      %v2178 = vrot.slane %v372, 3
      %v2179 = vsel %vm2166, %v2176, %v2178
      %v2180 = vrot.slane %v373, 3
      %v2181 = vsel %vm2166, %v2178, %v2180
      %v2182 = vrot.slane %v374, 3
      %v2183 = vsel %vm2166, %v2180, %v2182
      %v2184 = vrot.slane %v375, 3
      %v2185 = vsel %vm2166, %v2182, %v2184
      %v2186 = vrot.slane %v376, 3
      %v2187 = vsel %vm2166, %v2184, %v2186
      %v2188 = vrot.slane %v377, 3
      %v2189 = vsel %vm2166, %v2186, %v2188
      %v2190 = vrot.slane %v378, 3
      %v2191 = vsel %vm2166, %v2188, %v2190
      %v2192 = vrot.slane %v379, 3
      %v2193 = vsel %vm2166, %v2190, %v2192
      %v2194 = vrot.slane %v380, 3
      %v2195 = vsel %vm2166, %v2192, %v2194
      %v2196 = vrot.slane %v381, 3
      %v2197 = vsel %vm2166, %v2194, %v2196
      %v2198 = vrot.slane %v1066, 3
      %v2199 = vsel %vm2166, %v2196, %v2198
      %v2200 = vrot.slane %v1734, 3
      %v2201 = vsel %vm2166, %v2198, %v2200
      %v2202 = vrot.slane %v1735, 3
      %v2203 = vsel %vm2166, %v2200, %v2202
      %v2205 = vsel %vm532, %v2169, 0
      %v2208 = vsel %vm532, %v2171, 0
      %v2211 = vsel %vm532, %v2173, 0
      %v2214 = vsel %vm532, %v2175, 0
      %v2217 = vsel %vm532, %v2177, 0
      %v2220 = vsel %vm532, %v2179, 0
      %v2223 = vsel %vm532, %v2181, 0
      %v2226 = vsel %vm532, %v2183, 0
      %v2229 = vsel %vm532, %v2185, 0
      %v2232 = vsel %vm532, %v2187, 0
      %v2235 = vsel %vm532, %v2189, 0
      %v2238 = vsel %vm532, %v2191, 0
      %v2241 = vsel %vm532, %v2193, 0
      %v2244 = vsel %vm532, %v2195, 0
      %v2247 = vsel %vm532, %v2197, 0
      %v2250 = vsel %vm532, %v2199, 0
      %v2253 = vsel %vm532, %v2201, 0
      %v2256 = vsel %vm532, %v2203, 0
      %v2259 = vsel %vm587, %v2165, 0
      %2261 = vmatpush.bf16.msra.mxu0 0
      %2262 = vmatpush.bf16.msra.mxu0 0
      %2263 = vmatpush.bf16.msra.mxu0 0
      %2264 = vmatpush.bf16.msra.mxu0 0
      %2265 = vmatpush.bf16.msra.mxu0 0
      %2266 = vmatpush.bf16.msra.mxu0 0
      %2267 = vmatpush.bf16.msra.mxu0 0
      %2268 = vmatpush.bf16.msra.mxu0 %v2259
      %2269 = vmatmul.bf16.gmra.mxu0 %v2205
      %v2270 = vpop.f32.mrf.mxu0
      %v2271 = vadd.f32 0.0, %v2270
      %v2272 = vpop.f32.mrf.mxu0
      %v2273 = vadd.f32 0.0, %v2272
      %2274 = vmatmul.bf16.gmra.mxu0 %v2208
      %v2275 = vpop.f32.mrf.mxu0
      %v2276 = vadd.f32 0.0, %v2275
      %v2277 = vpop.f32.mrf.mxu0
      %v2278 = vadd.f32 0.0, %v2277
      %2279 = vmatmul.bf16.gmra.mxu0 %v2211
      %v2280 = vpop.f32.mrf.mxu0
      %v2281 = vadd.f32 0.0, %v2280
      %v2282 = vpop.f32.mrf.mxu0
      %v2283 = vadd.f32 0.0, %v2282
      %2284 = vmatmul.bf16.gmra.mxu0 %v2214
      %v2285 = vpop.f32.mrf.mxu0
      %v2286 = vadd.f32 0.0, %v2285
      %v2287 = vpop.f32.mrf.mxu0
      %v2288 = vadd.f32 0.0, %v2287
      %2289 = vmatmul.bf16.gmra.mxu0 %v2217
      %v2290 = vpop.f32.mrf.mxu0
      %v2291 = vadd.f32 0.0, %v2290
      %v2292 = vpop.f32.mrf.mxu0
      %v2293 = vadd.f32 0.0, %v2292
      %2294 = vmatmul.bf16.gmra.mxu0 %v2220
      %v2295 = vpop.f32.mrf.mxu0
      %v2296 = vadd.f32 0.0, %v2295
      %v2297 = vpop.f32.mrf.mxu0
      %v2298 = vadd.f32 0.0, %v2297
      %2299 = vmatmul.bf16.gmra.mxu0 %v2223
      %v2300 = vpop.f32.mrf.mxu0
      %v2301 = vadd.f32 0.0, %v2300
      %v2302 = vpop.f32.mrf.mxu0
      %v2303 = vadd.f32 0.0, %v2302
      %2304 = vmatmul.bf16.gmra.mxu0 %v2226
      %v2305 = vpop.f32.mrf.mxu0
      %v2306 = vadd.f32 0.0, %v2305
      %v2307 = vpop.f32.mrf.mxu0
      %v2308 = vadd.f32 0.0, %v2307
      %2309 = vmatmul.bf16.gmra.mxu0 %v2229
      %v2310 = vpop.f32.mrf.mxu0
      %v2311 = vadd.f32 0.0, %v2310
      %v2312 = vpop.f32.mrf.mxu0
      %v2313 = vadd.f32 0.0, %v2312
      %2314 = vmatmul.bf16.gmra.mxu0 %v2232
      %v2315 = vpop.f32.mrf.mxu0
      %v2316 = vadd.f32 0.0, %v2315
      %v2317 = vpop.f32.mrf.mxu0
      %v2318 = vadd.f32 0.0, %v2317
      %2319 = vmatmul.bf16.gmra.mxu0 %v2235
      %v2320 = vpop.f32.mrf.mxu0
      %v2321 = vadd.f32 0.0, %v2320
      %v2322 = vpop.f32.mrf.mxu0
      %v2323 = vadd.f32 0.0, %v2322
      %2324 = vmatmul.bf16.gmra.mxu0 %v2238
      %v2325 = vpop.f32.mrf.mxu0
      %v2326 = vadd.f32 0.0, %v2325
      %v2327 = vpop.f32.mrf.mxu0
      %v2328 = vadd.f32 0.0, %v2327
      %2329 = vmatmul.bf16.gmra.mxu0 %v2241
      %v2330 = vpop.f32.mrf.mxu0
      %v2331 = vadd.f32 0.0, %v2330
      %v2332 = vpop.f32.mrf.mxu0
      %v2333 = vadd.f32 0.0, %v2332
      %2334 = vmatmul.bf16.gmra.mxu0 %v2244
      %v2335 = vpop.f32.mrf.mxu0
      %v2336 = vadd.f32 0.0, %v2335
      %v2337 = vpop.f32.mrf.mxu0
      %v2338 = vadd.f32 0.0, %v2337
      %2339 = vmatmul.bf16.gmra.mxu0 %v2247
      %v2340 = vpop.f32.mrf.mxu0
      %v2341 = vadd.f32 0.0, %v2340
      %v2342 = vpop.f32.mrf.mxu0
      %v2343 = vadd.f32 0.0, %v2342
      %2344 = vmatmul.bf16.gmra.mxu0 %v2250
      %v2345 = vpop.f32.mrf.mxu0
      %v2346 = vadd.f32 0.0, %v2345
      %v2347 = vpop.f32.mrf.mxu0
      %v2348 = vadd.f32 0.0, %v2347
      %2349 = vmatmul.bf16.gmra.mxu0 %v2253
      %v2350 = vpop.f32.mrf.mxu0
      %v2351 = vadd.f32 0.0, %v2350
      %v2352 = vpop.f32.mrf.mxu0
      %v2353 = vadd.f32 0.0, %v2352
      %2354 = vmatmul.bf16.gmra.mxu0 %v2256
      %v2355 = vpop.f32.mrf.mxu0
      %v2356 = vadd.f32 0.0, %v2355
      %v2357 = vpop.f32.mrf.mxu0
      %v2358 = vadd.f32 0.0, %v2357
      %2359 = vdwg.mxu0
      %v2360 = vadd.f32 %v2128, %v2271
      %v2361 = vadd.f32 %v2129, %v2273
      %v2362 = vadd.f32 %v2130, %v2276
      %v2363 = vadd.f32 %v2131, %v2278
      %v2364 = vadd.f32 %v2132, %v2281
      %v2365 = vadd.f32 %v2133, %v2283
      %v2366 = vadd.f32 %v2134, %v2286
      %v2367 = vadd.f32 %v2135, %v2288
      %v2368 = vadd.f32 %v2136, %v2291
      %v2369 = vadd.f32 %v2137, %v2293
      %v2370 = vadd.f32 %v2138, %v2296
      %v2371 = vadd.f32 %v2139, %v2298
      %v2372 = vadd.f32 %v2140, %v2301
      %v2373 = vadd.f32 %v2141, %v2303
      %v2374 = vadd.f32 %v2142, %v2306
      %v2375 = vadd.f32 %v2143, %v2308
      %v2376 = vadd.f32 %v2144, %v2311
      %v2377 = vadd.f32 %v2145, %v2313
      %v2378 = vadd.f32 %v2146, %v2316
      %v2379 = vadd.f32 %v2147, %v2318
      %v2380 = vadd.f32 %v2148, %v2321
      %v2381 = vadd.f32 %v2149, %v2323
      %v2382 = vadd.f32 %v2150, %v2326
      %v2383 = vadd.f32 %v2151, %v2328
      %v2384 = vadd.f32 %v2152, %v2331
      %v2385 = vadd.f32 %v2153, %v2333
      %v2386 = vadd.f32 %v2154, %v2336
      %v2387 = vadd.f32 %v2155, %v2338
      %v2388 = vadd.f32 %v2156, %v2341
      %v2389 = vadd.f32 %v2157, %v2343
      %v2390 = vadd.f32 %v2158, %v2346
      %v2391 = vadd.f32 %v2159, %v2348
      %v2392 = vadd.f32 %v2160, %v2351
      %v2393 = vadd.f32 %v2161, %v2353
      %v2394 = vadd.f32 %v2162, %v2356
      %v2395 = vadd.f32 %v2163, %v2358
      %v2396 = vld [vmem:[%s226] sm:$0x1]
      %v2398 = vperm.slane %v2396, 0
      %v2400 = vadd.f32 %v2360, %v2398
      %v2401 = vadd.f32 %v2361, %v2398
      %v2402 = vadd.f32 %v2362, %v2398
      %v2403 = vadd.f32 %v2363, %v2398
      %v2404 = vadd.f32 %v2364, %v2398
      %v2405 = vadd.f32 %v2365, %v2398
      %v2406 = vadd.f32 %v2366, %v2398
      %v2407 = vadd.f32 %v2367, %v2398
      %v2408 = vadd.f32 %v2368, %v2398
      %v2409 = vadd.f32 %v2369, %v2398
      %v2410 = vadd.f32 %v2370, %v2398
      %v2411 = vadd.f32 %v2371, %v2398
      %v2412 = vadd.f32 %v2372, %v2398
      %v2413 = vadd.f32 %v2373, %v2398
      %v2414 = vadd.f32 %v2374, %v2398
      %v2415 = vadd.f32 %v2375, %v2398
      %v2416 = vadd.f32 %v2376, %v2398
      %v2417 = vadd.f32 %v2377, %v2398
      %v2418 = vadd.f32 %v2378, %v2398
      %v2419 = vadd.f32 %v2379, %v2398
      %v2420 = vadd.f32 %v2380, %v2398
      %v2421 = vadd.f32 %v2381, %v2398
      %v2422 = vadd.f32 %v2382, %v2398
      %v2423 = vadd.f32 %v2383, %v2398
      %v2424 = vadd.f32 %v2384, %v2398
      %v2425 = vadd.f32 %v2385, %v2398
      %v2426 = vadd.f32 %v2386, %v2398
      %v2427 = vadd.f32 %v2387, %v2398
      %v2428 = vadd.f32 %v2388, %v2398
      %v2429 = vadd.f32 %v2389, %v2398
      %v2430 = vadd.f32 %v2390, %v2398
      %v2431 = vadd.f32 %v2391, %v2398
      %v2432 = vadd.f32 %v2392, %v2398
      %v2433 = vadd.f32 %v2393, %v2398
      %v2434 = vadd.f32 %v2394, %v2398
      %v2435 = vadd.f32 %v2395, %v2398
      %v2436 = vmax.f32 %v2400, 0.0
      %v2437 = vmax.f32 %v2401, 0.0
      %v2438 = vmax.f32 %v2402, 0.0
      %v2439 = vmax.f32 %v2403, 0.0
      %v2440 = vmax.f32 %v2404, 0.0
      %v2441 = vmax.f32 %v2405, 0.0
      %v2442 = vmax.f32 %v2406, 0.0
      %v2443 = vmax.f32 %v2407, 0.0
      %v2444 = vmax.f32 %v2408, 0.0
      %v2445 = vmax.f32 %v2409, 0.0
      %v2446 = vmax.f32 %v2410, 0.0
      %v2447 = vmax.f32 %v2411, 0.0
      %v2448 = vmax.f32 %v2412, 0.0
      %v2449 = vmax.f32 %v2413, 0.0
      %v2450 = vmax.f32 %v2414, 0.0
      %v2451 = vmax.f32 %v2415, 0.0
      %v2452 = vmax.f32 %v2416, 0.0
      %v2453 = vmax.f32 %v2417, 0.0
      %v2454 = vmax.f32 %v2418, 0.0
      %v2455 = vmax.f32 %v2419, 0.0
      %v2456 = vmax.f32 %v2420, 0.0
      %v2457 = vmax.f32 %v2421, 0.0
      %v2458 = vmax.f32 %v2422, 0.0
      %v2459 = vmax.f32 %v2423, 0.0
      %v2460 = vmax.f32 %v2424, 0.0
      %v2461 = vmax.f32 %v2425, 0.0
      %v2462 = vmax.f32 %v2426, 0.0
      %v2463 = vmax.f32 %v2427, 0.0
      %v2464 = vmax.f32 %v2428, 0.0
      %v2465 = vmax.f32 %v2429, 0.0
      %v2466 = vmax.f32 %v2430, 0.0
      %v2467 = vmax.f32 %v2431, 0.0
      %v2468 = vmax.f32 %v2432, 0.0
      %v2469 = vmax.f32 %v2433, 0.0
      %v2470 = vmax.f32 %v2434, 0.0
      %v2471 = vmax.f32 %v2435, 0.0
      %2472 = vst [vmem:[%s238] sm:$0xff] %v2436
      %2473 = vst [vmem:[%s238 + $0x8] sm:$0xff] %v2437
      %2474 = vst [vmem:[%s238 + $0x10] sm:$0xff] %v2438
      %2475 = vst [vmem:[%s238 + $0x18] sm:$0xff] %v2439
      %2476 = vst [vmem:[%s238 + $0x20] sm:$0xff] %v2440
      %2477 = vst [vmem:[%s238 + $0x28] sm:$0xff] %v2441
      %2478 = vst [vmem:[%s238 + $0x30] sm:$0xff] %v2442
      %2479 = vst [vmem:[%s238 + $0x38] sm:$0xff] %v2443
      %2480 = vst [vmem:[%s238 + $0x40] sm:$0xff] %v2444
      %2481 = vst [vmem:[%s238 + $0x48] sm:$0xff] %v2445
      %2482 = vst [vmem:[%s238 + $0x50] sm:$0xff] %v2446
      %2483 = vst [vmem:[%s238 + $0x58] sm:$0xff] %v2447
      %2484 = vst [vmem:[%s238 + $0x60] sm:$0xff] %v2448
      %2485 = vst [vmem:[%s238 + $0x68] sm:$0xff] %v2449
      %2486 = vst [vmem:[%s238 + $0x70] sm:$0xff] %v2450
      %2487 = vst [vmem:[%s238 + $0x78] sm:$0xff] %v2451
      %2488 = vst [vmem:[%s238 + $0x80] sm:$0xff] %v2452
      %2489 = vst [vmem:[%s238 + $0x88] sm:$0xff] %v2453
      %2490 = vst [vmem:[%s238 + $0x90] sm:$0xff] %v2454
      %2491 = vst [vmem:[%s238 + $0x98] sm:$0xff] %v2455
      %2492 = vst [vmem:[%s238 + $0xa0] sm:$0xff] %v2456
      %2493 = vst [vmem:[%s238 + $0xa8] sm:$0xff] %v2457
      %2494 = vst [vmem:[%s238 + $0xb0] sm:$0xff] %v2458
      %2495 = vst [vmem:[%s238 + $0xb8] sm:$0xff] %v2459
      %2496 = vst [vmem:[%s238 + $0xc0] sm:$0xff] %v2460
      %2497 = vst [vmem:[%s238 + $0xc8] sm:$0xff] %v2461
      %2498 = vst [vmem:[%s238 + $0xd0] sm:$0xff] %v2462
      %2499 = vst [vmem:[%s238 + $0xd8] sm:$0xff] %v2463
      %2500 = vst [vmem:[%s238 + $0xe0] sm:$0xff] %v2464
      %2501 = vst [vmem:[%s238 + $0xe8] sm:$0xff] %v2465
      %2502 = vst [vmem:[%s238 + $0xf0] sm:$0xff] %v2466
      %2503 = vst [vmem:[%s238 + $0xf8] sm:$0xff] %v2467
      %2504 = vst [vmem:[%s238 + $0x100] sm:$0xff] %v2468
      %2505 = vst [vmem:[%s238 + $0x108] sm:$0xff] %v2469
      %2506 = vst [vmem:[%s238 + $0x110] sm:$0xff] %v2470
      %2507 = vst [vmem:[%s238 + $0x118] sm:$0xff] %v2471
      %s2508 = smul.u32 36, %s21
      %p2509 = scmp.lt.s32.totalorder %s19, 1
      %s2510 = scalar_select %p2509, %s19, 1
      %p2511 = scmp.lt.s32.totalorder %s2508, 35
      %s2512 = scalar_select %p2511, %s2508, 35
      %p2513 = scmp.lt.s32.totalorder %s20, 0
      %s2514 = scalar_select %p2513, %s20, 0
      %s2515 = sadd.s32 %s2514, %s2512
      %s2516 = smul.addr %s2510, 36
      %s2517 = sadd.s32 %s2515, %s2516
      %s2518 = smul.addr %s2517, 8
      %s2519 = scalar_lea.vmem %s3, %s2518
      // Predicated region
      $region33: #{basic_conv2d.1} parent=31 // pred_check
        %p2520 = pneg %p133
      $region34: #{basic_conv2d.1} parent=31 // pred_check_branch
        %2522 = sbr.rel (%p2520) target = $region36
      $region35: #{basic_conv2d.1} parent=31 // pred_region
        %s2523 = smul.u32 36, %s21
      $region36: #{basic_conv2d.1} parent=31 // pred_fallthru
        _
    $region32: #{basic_conv2d.1} parent=5 // pred_fallthru
      _
    %p2524 = scmp.le.s32.totalorder 2, %s9
    // Predicated region
    $region37: #{basic_conv2d.1} parent=5 // pred_check
      %p2525 = pneg %p2524
    $region38: #{basic_conv2d.1} parent=5 // pred_check_branch
      %2527 = sbr.rel (%p2525) target = $region40
    $region39: #{basic_conv2d.1} parent=5 // pred_region
      %s2528 = ssub.s32 %s9, 2
      // Predicated region
      $region41: #{basic_conv2d.1} parent=39 // pred_check
        %p2529 = pneg %p139
      $region42: #{basic_conv2d.1} parent=39 // pred_check_branch
        %2531 = sbr.rel (%p2529) target = $region44
      $region43: #{basic_conv2d.1} parent=39 // pred_region
        %s2532 = smul.u32 36, %s24
        %p2533 = scmp.lt.s32.totalorder %s22, 1
        %s2534 = scalar_select %p2533, %s22, 1
        %p2535 = scmp.lt.s32.totalorder %s2532, 35
        %s2536 = scalar_select %p2535, %s2532, 35
        %p2537 = scmp.lt.s32.totalorder %s23, 0
        %s2538 = scalar_select %p2537, %s23, 0
        %s2539 = sadd.s32 %s2538, %s2536
        %s2540 = smul.addr %s2534, 36
        %s2541 = sadd.s32 %s2539, %s2540
        %s2542 = smul.addr %s2541, 8
        %s2543 = scalar_lea.vmem %s3, %s2542
      $region44: #{basic_conv2d.1} parent=39 // pred_fallthru
        _
    $region40: #{basic_conv2d.1} parent=5 // pred_fallthru
      _
  $region6: #{basic_conv2d.1} parent=0 // loop_footer
    %s13 = sadd.s32 1, %s9
  $region7: #{basic_conv2d.1} parent=0 // loop_footer_branch
    %8 = sbr.rel target = $region3
  $region8: #{basic_conv2d.1} parent=0 // loop_exit
    _

</llo_original>
